<compile_context>
chip_gen: v7x
topology: tpu7x:2x2x1
jax: 0.10.0
libtpu: 0.0.40
codegen_flags: <defaults>
</compile_context>

<pallas_src>
import functools
import math

import jax
import jax.numpy as jnp
from jax.experimental import pallas as pl
from jax.experimental.pallas import tpu as pltpu

_LN_EPS = 1e-5


def _round_up(n, m):
    return ((n + m - 1) // m) * m


def _vmem_limit(estimate_bytes):
    # Explicit scoped-VMEM limit: 2x headroom over the static estimate, clamped to
    # [16 MiB, 64 MiB] so it is valid on v5e/v6e (128 MiB phys) and v7x (64 MiB phys).
    return int(min(max(2 * estimate_bytes, 16 * 1024 * 1024), 64 * 1024 * 1024))


# ----------------------------------------------------------------------------
# Fused multi-head attention sublayer:
#   out  = LayerNorm(x + MultiHeadAttention(x, mem, mem, mask))
#   attn = per-head softmax probabilities (returned, as the reference API requires)
# grid = (B, Tq // tq); both axes "parallel" (heads handled inside the kernel).
# ----------------------------------------------------------------------------
def _mha_block_kernel(x_ref, mem_ref, mask_ref,
                      wq_ref, bq_ref, wk_ref, bk_ref, wv_ref, bv_ref,
                      wo_ref, bo_ref, g_ref, be_ref,
                      attn_ref, out_ref, ctx_ref,
                      *, n_heads, head_dim, scale, eps):
    x = x_ref[...]                                   # (tq, D) f32 residual input
    xb = x.astype(jnp.bfloat16)
    memb = mem_ref[...].astype(jnp.bfloat16)         # (Tk, D) bf16

    # Full-width projections: one wide MXU matmul each (bf16 in, f32 accumulate).
    q = jnp.dot(xb, wq_ref[...], preferred_element_type=jnp.float32) + bq_ref[...]
    k = jnp.dot(memb, wk_ref[...], preferred_element_type=jnp.float32) + bk_ref[...]
    v = jnp.dot(memb, wv_ref[...], preferred_element_type=jnp.float32) + bv_ref[...]
    q = q * scale                                    # fold 1/sqrt(dh) into Q

    mask = mask_ref[...] > 0                         # (tq, Tk) bool (mask stored bf16)
    neg_inf = jnp.float32(-1e9)

    # n_heads is a static Python int -> this loop unrolls at trace time.
    for h in range(n_heads):
        lo = h * head_dim
        hi = lo + head_dim
        qh = q[:, lo:hi].astype(jnp.bfloat16)        # (tq, dh)
        kh = k[:, lo:hi].astype(jnp.bfloat16)        # (Tk, dh)
        vh = v[:, lo:hi].astype(jnp.bfloat16)        # (Tk, dh)

        # Scores: contract head dims directly (Q @ K^T without materializing K^T).
        s = jax.lax.dot_general(qh, kh,
                                dimension_numbers=(((1,), (1,)), ((), ())),
                                preferred_element_type=jnp.float32)      # (tq, Tk)
        s = jnp.where(mask, s, neg_inf)
        s = s - jnp.max(s, axis=-1, keepdims=True)
        e = jnp.exp(s)
        p = e / jnp.sum(e, axis=-1, keepdims=True)   # exact normalization (API output)
        attn_ref[h] = p.astype(attn_ref.dtype)

        ctx = jnp.dot(p.astype(jnp.bfloat16), vh,
                      preferred_element_type=jnp.float32)                # (tq, dh)
        # Stage this head's context into its column block of the (tq, D) scratch.
        ctx_ref[:, lo:hi] = ctx

    # ONE full-width output projection instead of H rank-dh partial matmuls.
    o = jnp.dot(ctx_ref[...].astype(jnp.bfloat16), wo_ref[...],
                preferred_element_type=jnp.float32) + bo_ref[...]        # (tq, D)

    y = x + o                                        # residual (f32)
    mu = jnp.mean(y, axis=-1, keepdims=True)
    var = jnp.mean((y - mu) ** 2, axis=-1, keepdims=True)
    yn = (y - mu) * jax.lax.rsqrt(var + eps)
    out_ref[...] = (yn * g_ref[...] + be_ref[...]).astype(out_ref.dtype)


def _q_tile(tq_total):
    # Tile the query axis so long sequences pipeline (and feed both v7x TensorCores);
    # small sequences use the full extent.
    for t in (512, 256, 128):
        if tq_total % t == 0 and tq_total > t:
            return t
    return tq_total


def mha_block(p, x, mem, mask, gamma, beta, n_heads, attn_dtype=jnp.float32):
    """Fused MHA sublayer: LayerNorm(x + MultiHeadAttn(x, mem, mem, mask)).

    x:    (B, Tq, D)  query / residual input (f32)
    mem:  (B, Tk, D)  key/value input (== x for self-attention)
    mask: (B, Tq, Tk) bfloat16 {0,1}
    Returns (out (B,Tq,D) f32, attention probabilities (B,H,Tq,Tk)).
    """
    B, Tq, D = x.shape
    Tk = mem.shape[1]
    H = n_heads
    dh = D // H
    scale = 1.0 / math.sqrt(dh)
    tq = _q_tile(Tq)
    n_qt = Tq // tq

    est = (2 * tq * D * 4 + 2 * Tk * D * 4 + 2 * tq * Tk * 2       # x / mem / mask tiles
           + 2 * 4 * D * D * 2                                     # 4 bf16 weight matrices
           + 2 * H * tq * Tk * 4 + 2 * tq * D * 4                  # attn + out tiles
           + tq * D * 4 + (tq + 2 * Tk) * D * 4 + 4 * tq * Tk * 4) # scratch + live values

    kernel = functools.partial(_mha_block_kernel, n_heads=H, head_dim=dh,
                               scale=scale, eps=_LN_EPS)

    attn, out = pl.pallas_call(
        kernel,
        out_shape=(
            jax.ShapeDtypeStruct((B, H, Tq, Tk), attn_dtype),
            jax.ShapeDtypeStruct((B, Tq, D), x.dtype),
        ),
        grid=(B, n_qt),
        in_specs=[
            pl.BlockSpec((None, tq, D), lambda b, t: (b, t, 0)),    # x
            pl.BlockSpec((None, Tk, D), lambda b, t: (b, 0, 0)),    # mem
            pl.BlockSpec((None, tq, Tk), lambda b, t: (b, t, 0)),   # mask (bf16)
            pl.BlockSpec((D, D), lambda b, t: (0, 0)),              # wq
            pl.BlockSpec((1, D), lambda b, t: (0, 0)),              # bq
            pl.BlockSpec((D, D), lambda b, t: (0, 0)),              # wk
            pl.BlockSpec((1, D), lambda b, t: (0, 0)),              # bk
            pl.BlockSpec((D, D), lambda b, t: (0, 0)),              # wv
            pl.BlockSpec((1, D), lambda b, t: (0, 0)),              # bv
            pl.BlockSpec((D, D), lambda b, t: (0, 0)),              # wo
            pl.BlockSpec((1, D), lambda b, t: (0, 0)),              # bo
            pl.BlockSpec((1, D), lambda b, t: (0, 0)),              # LN gamma
            pl.BlockSpec((1, D), lambda b, t: (0, 0)),              # LN beta
        ],
        out_specs=(
            pl.BlockSpec((None, H, tq, Tk), lambda b, t: (b, 0, t, 0)),
            pl.BlockSpec((None, tq, D), lambda b, t: (b, t, 0)),
        ),
        scratch_shapes=[pltpu.VMEM((tq, D), jnp.float32)],          # per-head context staging
        compiler_params=pltpu.CompilerParams(
            dimension_semantics=("parallel", "parallel"),
            vmem_limit_bytes=_vmem_limit(est)),
    )(x, mem, mask,
      p["wq"], p["bq"], p["wk"], p["bk"], p["wv"], p["bv"],
      p["wo"], p["bo"], gamma, beta)
    return out, attn


# ----------------------------------------------------------------------------
# Fused feed-forward + residual + LayerNorm kernel (row-tiled grid, bf16 matmuls)
# ----------------------------------------------------------------------------
def _ffn_block_kernel(x_ref, w1_ref, b1_ref, w2_ref, b2_ref, g_ref, be_ref,
                      out_ref, *, eps):
    x = x_ref[...]                                                   # (tile, D) f32
    h1 = jnp.dot(x.astype(jnp.bfloat16), w1_ref[...],
                 preferred_element_type=jnp.float32) + b1_ref[...]
    h1 = jnp.maximum(h1, 0.0)
    y = jnp.dot(h1.astype(jnp.bfloat16), w2_ref[...],
                preferred_element_type=jnp.float32) + b2_ref[...]
    y = x + y
    mu = jnp.mean(y, axis=-1, keepdims=True)
    var = jnp.mean((y - mu) ** 2, axis=-1, keepdims=True)
    yn = (y - mu) * jax.lax.rsqrt(var + eps)
    out_ref[...] = (yn * g_ref[...] + be_ref[...]).astype(out_ref.dtype)


def ffn_block(x2d, w1, b1, w2, b2, gamma, beta):
    """LayerNorm(x + FFN(x)) over flattened rows. x2d: (N, D) f32."""
    N, D = x2d.shape
    Hd = w1.shape[1]
    tile = 512 if N >= 512 else _round_up(N, 8)      # large tiles; 8-sublane multiple
    n_pad = _round_up(N, tile)                       # pad instead of shrinking the tile
    x_p = x2d if n_pad == N else jnp.pad(x2d, ((0, n_pad - N), (0, 0)))

    est = (2 * tile * D * 4 * 2                      # x / out tiles (double buffered)
           + 2 * (D * Hd + Hd * D) * 2               # bf16 weights (double buffered)
           + 2 * tile * Hd * 4)                      # live hidden activation

    out = pl.pallas_call(
        functools.partial(_ffn_block_kernel, eps=_LN_EPS),
        out_shape=jax.ShapeDtypeStruct((n_pad, D), x2d.dtype),
        grid=(n_pad // tile,),
        in_specs=[
            pl.BlockSpec((tile, D), lambda i: (i, 0)),
            pl.BlockSpec((D, Hd), lambda i: (0, 0)),
            pl.BlockSpec((1, Hd), lambda i: (0, 0)),
            pl.BlockSpec((Hd, D), lambda i: (0, 0)),
            pl.BlockSpec((1, D), lambda i: (0, 0)),
            pl.BlockSpec((1, D), lambda i: (0, 0)),
            pl.BlockSpec((1, D), lambda i: (0, 0)),
        ],
        out_specs=pl.BlockSpec((tile, D), lambda i: (i, 0)),
        compiler_params=pltpu.CompilerParams(
            dimension_semantics=("parallel",),
            vmem_limit_bytes=_vmem_limit(est)),
    )(x_p, w1, b1, w2, b2, gamma, beta)
    return out if n_pad == N else out[:N]


# ----------------------------------------------------------------------------
# Model glue (plain JAX)
# ----------------------------------------------------------------------------
def positional_encoding(seq_len, d_model):
    pos = jnp.arange(seq_len, dtype=jnp.float32)[:, None]
    i = jnp.arange(d_model // 2, dtype=jnp.float32)[None, :]
    angle = pos / jnp.power(10000.0, (2.0 * i) / d_model)
    pe = jnp.zeros((seq_len, d_model), jnp.float32)
    pe = pe.at[:, 0::2].set(jnp.sin(angle))
    pe = pe.at[:, 1::2].set(jnp.cos(angle))
    return pe


def decoder_forward(params, x_tokens, encoder_outputs, src_mask, tgt_mask):
    B, Tq = x_tokens.shape
    D = params["embedding"].shape[1]
    Ts = encoder_outputs.shape[1]
    n_heads = params["n_heads"]

    # InputEmbedding (gather kept in JAX glue) * sqrt(d_model) + PositionalEncoding
    h = params["embedding"][x_tokens] * math.sqrt(D)
    h = h + positional_encoding(Tq, D)[None, :, :]

    # Squeeze / broadcast masks once, outside the kernels; carry them as bf16.
    tgt_mask_b = jnp.broadcast_to(tgt_mask, (B, 1, Tq, Tq))[:, 0].astype(jnp.bfloat16)
    src_mask_b = jnp.broadcast_to(src_mask, (B, 1, Tq, Ts))[:, 0].astype(jnp.bfloat16)

    all_masked_attention_scores = []
    all_cross_attention_scores = []
    for layer in params["layers"]:
        # masked self-attention + add&norm (one fused pallas_call)
        h, sa_scores = mha_block(layer["self_attn"], h, h, tgt_mask_b,
                                 layer["ln1_g"], layer["ln1_b"], n_heads)
        # cross-attention over encoder outputs + add&norm (one fused pallas_call)
        h, ca_scores = mha_block(layer["cross_attn"], h, encoder_outputs, src_mask_b,
                                 layer["ln2_g"], layer["ln2_b"], n_heads)
        # position-wise feed-forward + add&norm (one fused pallas_call)
        h = ffn_block(h.reshape(B * Tq, D),
                      layer["ffn_w1"], layer["ffn_b1"],
                      layer["ffn_w2"], layer["ffn_b2"],
                      layer["ln3_g"], layer["ln3_b"]).reshape(B, Tq, D)

        all_masked_attention_scores.append(sa_scores)
        all_cross_attention_scores.append(ca_scores)

    return h, all_masked_attention_scores, all_cross_attention_scores


# ----------------------------------------------------------------------------
# Deterministic parameter init (kernel-ready layouts: bf16 matmul weights,
# (1, D)-shaped biases / LN params — all re-layout hoisted out of the forward).
# ----------------------------------------------------------------------------
def init_params(key, vocab_size, d_model, n_heads, hidden_size, n_layers):
    keys = iter(jax.random.split(key, 8 + n_layers * 32))

    def nrm(shape, scale=0.02, dtype=jnp.bfloat16):
        return (scale * jax.random.normal(next(keys), shape, jnp.float32)).astype(dtype)

    def zeros(shape):
        return jnp.zeros(shape, jnp.float32)

    def attn_params():
        return {
            "wq": nrm((d_model, d_model)), "bq": zeros((1, d_model)),
            "wk": nrm((d_model, d_model)), "bk": zeros((1, d_model)),
            "wv": nrm((d_model, d_model)), "bv": zeros((1, d_model)),
            "wo": nrm((d_model, d_model)), "bo": zeros((1, d_model)),
        }

    layers = []
    for _ in range(n_layers):
        layers.append({
            "self_attn": attn_params(),
            "cross_attn": attn_params(),
            "ffn_w1": nrm((d_model, hidden_size)),
            "ffn_b1": zeros((1, hidden_size)),
            "ffn_w2": nrm((hidden_size, d_model)),
            "ffn_b2": zeros((1, d_model)),
            "ln1_g": jnp.ones((1, d_model), jnp.float32), "ln1_b": zeros((1, d_model)),
            "ln2_g": jnp.ones((1, d_model), jnp.float32), "ln2_b": zeros((1, d_model)),
            "ln3_g": jnp.ones((1, d_model), jnp.float32), "ln3_b": zeros((1, d_model)),
        })
    return {
        "embedding": nrm((vocab_size, d_model), scale=1.0, dtype=jnp.float32),
        "n_heads": n_heads,
        "layers": layers,
    }


# ----------------------------------------------------------------------------
# Main
# ----------------------------------------------------------------------------
if __name__ == "__main__":
    vocab_size, d_model, n_heads, hidden_size, n_layers = 50, 32, 4, 64, 2
    B, Tq, Ts = 2, 8, 8

    key = jax.random.PRNGKey(0)
    k_par, k_tok, k_enc = jax.random.split(key, 3)

    params = init_params(k_par, vocab_size, d_model, n_heads, hidden_size, n_layers)

    x_tokens = jax.random.randint(k_tok, (B, Tq), 0, vocab_size, dtype=jnp.int32)
    encoder_outputs = jax.random.normal(k_enc, (B, Ts, d_model), jnp.float32)
    src_mask = jnp.ones((B, 1, 1, Ts), jnp.float32)                      # padding mask (no padding)
    tgt_mask = jnp.broadcast_to(
        jnp.tril(jnp.ones((Tq, Tq), jnp.float32))[None, None], (B, 1, Tq, Tq))  # causal mask

    out, masked_scores, cross_scores = decoder_forward(
        params, x_tokens, encoder_outputs, src_mask, tgt_mask)

    out = jax.block_until_ready(out)
    for s in masked_scores + cross_scores:
        jax.block_until_ready(s)

    assert out.shape == (B, Tq, d_model)
    assert len(masked_scores) == n_layers and len(cross_scores) == n_layers
    assert masked_scores[0].shape == (B, n_heads, Tq, Tq)
    assert cross_scores[0].shape == (B, n_heads, Tq, Ts)
    # softmax rows sum to ~1 (exact divide used for the stored probabilities)
    assert jnp.allclose(jnp.sum(masked_scores[0], axis=-1), 1.0, atol=1e-3)
    assert jnp.allclose(jnp.sum(cross_scores[0], axis=-1), 1.0, atol=1e-3)
    # causal masking: no probability mass on future positions
    future = masked_scores[0] * (1.0 - jnp.tril(jnp.ones((Tq, Tq), jnp.float32)))
    assert float(jnp.max(jnp.abs(future))) < 1e-6
    assert bool(jnp.all(jnp.isfinite(out)))

    print("KERNEL_OK")
</pallas_src>

<mosaic_0001>
module attributes {stable_mosaic.version = 11 : i64} {
  func.func @_mha_block_kernel(%arg0: i32, %arg1: i32, %arg2: memref<1x8x32xf32, #tpu.memory_space<vmem>>, %arg3: memref<1x8x32xf32, #tpu.memory_space<vmem>>, %arg4: memref<1x8x8xbf16, #tpu.memory_space<vmem>>, %arg5: memref<32x32xbf16, #tpu.memory_space<vmem>>, %arg6: memref<1x32xf32, #tpu.memory_space<vmem>>, %arg7: memref<32x32xbf16, #tpu.memory_space<vmem>>, %arg8: memref<1x32xf32, #tpu.memory_space<vmem>>, %arg9: memref<32x32xbf16, #tpu.memory_space<vmem>>, %arg10: memref<1x32xf32, #tpu.memory_space<vmem>>, %arg11: memref<32x32xbf16, #tpu.memory_space<vmem>>, %arg12: memref<1x32xf32, #tpu.memory_space<vmem>>, %arg13: memref<1x32xf32, #tpu.memory_space<vmem>>, %arg14: memref<1x32xf32, #tpu.memory_space<vmem>>, %arg15: memref<1x4x8x8xf32, #tpu.memory_space<vmem>>, %arg16: memref<1x8x32xf32, #tpu.memory_space<vmem>>, %arg17: memref<8x32xf32, #tpu.memory_space<vmem>>) attributes {dimension_semantics = [#tpu.dimension_semantics<parallel>, #tpu.dimension_semantics<parallel>], iteration_bounds = array<i64: 2, 1>, scalar_prefetch = 0 : i64, scratch_operands = 1 : i64, tpu.core_type = #tpu.core_type<tc>, window_params = [{transform_indices = @transform_0, window_bounds = array<i64: 1, 8, 32>}, {transform_indices = @transform_1, window_bounds = array<i64: 1, 8, 32>}, {transform_indices = @transform_2, window_bounds = array<i64: 1, 8, 8>}, {pipeline_mode = #tpu.pipeline_mode<synchronous>, transform_indices = @transform_3, window_bounds = array<i64: 32, 32>}, {pipeline_mode = #tpu.pipeline_mode<synchronous>, transform_indices = @transform_4, window_bounds = array<i64: 1, 32>}, {pipeline_mode = #tpu.pipeline_mode<synchronous>, transform_indices = @transform_5, window_bounds = array<i64: 32, 32>}, {pipeline_mode = #tpu.pipeline_mode<synchronous>, transform_indices = @transform_6, window_bounds = array<i64: 1, 32>}, {pipeline_mode = #tpu.pipeline_mode<synchronous>, transform_indices = @transform_7, window_bounds = array<i64: 32, 32>}, {pipeline_mode = #tpu.pipeline_mode<synchronous>, transform_indices = @transform_8, window_bounds = array<i64: 1, 32>}, {pipeline_mode = #tpu.pipeline_mode<synchronous>, transform_indices = @transform_9, window_bounds = array<i64: 32, 32>}, {pipeline_mode = #tpu.pipeline_mode<synchronous>, transform_indices = @transform_10, window_bounds = array<i64: 1, 32>}, {pipeline_mode = #tpu.pipeline_mode<synchronous>, transform_indices = @transform_11, window_bounds = array<i64: 1, 32>}, {pipeline_mode = #tpu.pipeline_mode<synchronous>, transform_indices = @transform_12, window_bounds = array<i64: 1, 32>}, {transform_indices = @transform_13, window_bounds = array<i64: 1, 4, 8, 8>}, {transform_indices = @transform_14, window_bounds = array<i64: 1, 8, 32>}]} {
    %c0 = arith.constant 0 : index
    %c0_0 = arith.constant 0 : index
    %c0_1 = arith.constant 0 : index
    %0 = vector.load %arg2[%c0, %c0_0, %c0_1] : memref<1x8x32xf32, #tpu.memory_space<vmem>>, vector<1x8x32xf32>
    %1 = vector.shape_cast %0 : vector<1x8x32xf32> to vector<8x32xf32>
    %2 = arith.truncf %1 : vector<8x32xf32> to vector<8x32xbf16>
    %c0_2 = arith.constant 0 : index
    %c0_3 = arith.constant 0 : index
    %c0_4 = arith.constant 0 : index
    %3 = vector.load %arg3[%c0_2, %c0_3, %c0_4] : memref<1x8x32xf32, #tpu.memory_space<vmem>>, vector<1x8x32xf32>
    %4 = vector.shape_cast %3 : vector<1x8x32xf32> to vector<8x32xf32>
    %5 = arith.truncf %4 : vector<8x32xf32> to vector<8x32xbf16>
    %c0_5 = arith.constant 0 : index
    %c0_6 = arith.constant 0 : index
    %6 = vector.load %arg5[%c0_5, %c0_6] : memref<32x32xbf16, #tpu.memory_space<vmem>>, vector<32x32xbf16>
    %cst = arith.constant dense<0.000000e+00> : vector<8x32xf32>
    %7 = tpu.matmul %2, %6, %cst {dimension_numbers = #tpu.dot_dimension_numbers<[1], [0], [0], [1], [0, 0, 1, 1], [], []>} : vector<8x32xbf16>, vector<32x32xbf16>, vector<8x32xf32> -> vector<8x32xf32>
    %c0_7 = arith.constant 0 : index
    %c0_8 = arith.constant 0 : index
    %8 = vector.load %arg6[%c0_7, %c0_8] : memref<1x32xf32, #tpu.memory_space<vmem>>, vector<1x32xf32>
    %9 = vector.broadcast %8 : vector<1x32xf32> to vector<8x32xf32>
    %10 = arith.addf %7, %9 : vector<8x32xf32>
    %c0_9 = arith.constant 0 : index
    %c0_10 = arith.constant 0 : index
    %11 = vector.load %arg7[%c0_9, %c0_10] : memref<32x32xbf16, #tpu.memory_space<vmem>>, vector<32x32xbf16>
    %cst_11 = arith.constant dense<0.000000e+00> : vector<8x32xf32>
    %12 = tpu.matmul %5, %11, %cst_11 {dimension_numbers = #tpu.dot_dimension_numbers<[1], [0], [0], [1], [0, 0, 1, 1], [], []>} : vector<8x32xbf16>, vector<32x32xbf16>, vector<8x32xf32> -> vector<8x32xf32>
    %c0_12 = arith.constant 0 : index
    %c0_13 = arith.constant 0 : index
    %13 = vector.load %arg8[%c0_12, %c0_13] : memref<1x32xf32, #tpu.memory_space<vmem>>, vector<1x32xf32>
    %14 = vector.broadcast %13 : vector<1x32xf32> to vector<8x32xf32>
    %15 = arith.addf %12, %14 : vector<8x32xf32>
    %c0_14 = arith.constant 0 : index
    %c0_15 = arith.constant 0 : index
    %16 = vector.load %arg9[%c0_14, %c0_15] : memref<32x32xbf16, #tpu.memory_space<vmem>>, vector<32x32xbf16>
    %cst_16 = arith.constant dense<0.000000e+00> : vector<8x32xf32>
    %17 = tpu.matmul %5, %16, %cst_16 {dimension_numbers = #tpu.dot_dimension_numbers<[1], [0], [0], [1], [0, 0, 1, 1], [], []>} : vector<8x32xbf16>, vector<32x32xbf16>, vector<8x32xf32> -> vector<8x32xf32>
    %c0_17 = arith.constant 0 : index
    %c0_18 = arith.constant 0 : index
    %18 = vector.load %arg10[%c0_17, %c0_18] : memref<1x32xf32, #tpu.memory_space<vmem>>, vector<1x32xf32>
    %19 = vector.broadcast %18 : vector<1x32xf32> to vector<8x32xf32>
    %20 = arith.addf %17, %19 : vector<8x32xf32>
    %cst_19 = arith.constant 0.353553385 : f32
    %21 = vector.broadcast %cst_19 : f32 to vector<8x32xf32>
    %22 = arith.mulf %10, %21 : vector<8x32xf32>
    %c0_20 = arith.constant 0 : index
    %c0_21 = arith.constant 0 : index
    %c0_22 = arith.constant 0 : index
    %23 = vector.load %arg4[%c0_20, %c0_21, %c0_22] : memref<1x8x8xbf16, #tpu.memory_space<vmem>>, vector<1x8x8xbf16>
    %24 = vector.shape_cast %23 : vector<1x8x8xbf16> to vector<8x8xbf16>
    %cst_23 = arith.constant 0.000000e+00 : bf16
    %25 = vector.broadcast %cst_23 : bf16 to vector<8x8xbf16>
    %26 = arith.cmpf ogt, %24, %25 : vector<8x8xbf16>
    %27 = vector.extract_strided_slice %22 {offsets = [0, 0], sizes = [8, 8], strides = [1, 1]} : vector<8x32xf32> to vector<8x8xf32>
    %28 = arith.truncf %27 : vector<8x8xf32> to vector<8x8xbf16>
    %29 = vector.extract_strided_slice %15 {offsets = [0, 0], sizes = [8, 8], strides = [1, 1]} : vector<8x32xf32> to vector<8x8xf32>
    %30 = arith.truncf %29 : vector<8x8xf32> to vector<8x8xbf16>
    %31 = vector.extract_strided_slice %20 {offsets = [0, 0], sizes = [8, 8], strides = [1, 1]} : vector<8x32xf32> to vector<8x8xf32>
    %32 = arith.truncf %31 : vector<8x8xf32> to vector<8x8xbf16>
    %cst_24 = arith.constant dense<0.000000e+00> : vector<8x8xf32>
    %33 = tpu.matmul %28, %30, %cst_24 {dimension_numbers = #tpu.dot_dimension_numbers<[1], [1], [0], [0], [0, 0, 1, 0], [], []>} : vector<8x8xbf16>, vector<8x8xbf16>, vector<8x8xf32> -> vector<8x8xf32>
    %cst_25 = arith.constant -1.000000e+09 : f32
    %34 = vector.broadcast %cst_25 : f32 to vector<8x8xf32>
    %35 = arith.select %26, %33, %34 : vector<8x8xi1>, vector<8x8xf32>
    %cst_26 = arith.constant dense<0xFF800000> : vector<8xf32>
    %36 = vector.multi_reduction <maximumf>, %35, %cst_26 [1] : vector<8x8xf32> to vector<8xf32>
    %37 = vector.shape_cast %36 : vector<8xf32> to vector<8x1xf32>
    %38 = vector.broadcast %37 : vector<8x1xf32> to vector<8x8xf32>
    %39 = arith.subf %35, %38 : vector<8x8xf32>
    %40 = math.exp %39 : vector<8x8xf32>
    %cst_27 = arith.constant dense<0.000000e+00> : vector<8xf32>
    %41 = vector.multi_reduction <add>, %40, %cst_27 [1] : vector<8x8xf32> to vector<8xf32>
    %42 = vector.shape_cast %41 : vector<8xf32> to vector<8x1xf32>
    %43 = vector.broadcast %42 : vector<8x1xf32> to vector<8x8xf32>
    %44 = arith.divf %40, %43 : vector<8x8xf32>
    %c0_28 = arith.constant 0 : index
    %c0_29 = arith.constant 0 : index
    %c0_30 = arith.constant 0 : index
    %c0_31 = arith.constant 0 : index
    %45 = vector.load %arg15[%c0_28, %c0_29, %c0_30, %c0_31] : memref<1x4x8x8xf32, #tpu.memory_space<vmem>>, vector<1x1x8x8xf32>
    %46 = vector.shape_cast %45 : vector<1x1x8x8xf32> to vector<8x8xf32>
    %47 = vector.shape_cast %44 : vector<8x8xf32> to vector<1x1x8x8xf32>
    tpu.vector_store %arg15[%c0_28, %c0_29, %c0_30, %c0_31], %47 {strides = array<i32>} : memref<1x4x8x8xf32, #tpu.memory_space<vmem>>, vector<1x1x8x8xf32>,
    %48 = arith.truncf %44 : vector<8x8xf32> to vector<8x8xbf16>
    %cst_32 = arith.constant dense<0.000000e+00> : vector<8x8xf32>
    %49 = tpu.matmul %48, %32, %cst_32 {dimension_numbers = #tpu.dot_dimension_numbers<[1], [0], [0], [1], [0, 0, 1, 1], [], []>} : vector<8x8xbf16>, vector<8x8xbf16>, vector<8x8xf32> -> vector<8x8xf32>
    %c0_33 = arith.constant 0 : index
    %c0_34 = arith.constant 0 : index
    %50 = vector.load %arg17[%c0_33, %c0_34] : memref<8x32xf32, #tpu.memory_space<vmem>>, vector<8x8xf32>
    tpu.vector_store %arg17[%c0_33, %c0_34], %49 {strides = array<i32>} : memref<8x32xf32, #tpu.memory_space<vmem>>, vector<8x8xf32>,
    %51 = vector.extract_strided_slice %22 {offsets = [0, 8], sizes = [8, 8], strides = [1, 1]} : vector<8x32xf32> to vector<8x8xf32>
    %52 = arith.truncf %51 : vector<8x8xf32> to vector<8x8xbf16>
    %53 = vector.extract_strided_slice %15 {offsets = [0, 8], sizes = [8, 8], strides = [1, 1]} : vector<8x32xf32> to vector<8x8xf32>
    %54 = arith.truncf %53 : vector<8x8xf32> to vector<8x8xbf16>
    %55 = vector.extract_strided_slice %20 {offsets = [0, 8], sizes = [8, 8], strides = [1, 1]} : vector<8x32xf32> to vector<8x8xf32>
    %56 = arith.truncf %55 : vector<8x8xf32> to vector<8x8xbf16>
    %cst_35 = arith.constant dense<0.000000e+00> : vector<8x8xf32>
    %57 = tpu.matmul %52, %54, %cst_35 {dimension_numbers = #tpu.dot_dimension_numbers<[1], [1], [0], [0], [0, 0, 1, 0], [], []>} : vector<8x8xbf16>, vector<8x8xbf16>, vector<8x8xf32> -> vector<8x8xf32>
    %cst_36 = arith.constant -1.000000e+09 : f32
    %58 = vector.broadcast %cst_36 : f32 to vector<8x8xf32>
    %59 = arith.select %26, %57, %58 : vector<8x8xi1>, vector<8x8xf32>
    %cst_37 = arith.constant dense<0xFF800000> : vector<8xf32>
    %60 = vector.multi_reduction <maximumf>, %59, %cst_37 [1] : vector<8x8xf32> to vector<8xf32>
    %61 = vector.shape_cast %60 : vector<8xf32> to vector<8x1xf32>
    %62 = vector.broadcast %61 : vector<8x1xf32> to vector<8x8xf32>
    %63 = arith.subf %59, %62 : vector<8x8xf32>
    %64 = math.exp %63 : vector<8x8xf32>
    %cst_38 = arith.constant dense<0.000000e+00> : vector<8xf32>
    %65 = vector.multi_reduction <add>, %64, %cst_38 [1] : vector<8x8xf32> to vector<8xf32>
    %66 = vector.shape_cast %65 : vector<8xf32> to vector<8x1xf32>
    %67 = vector.broadcast %66 : vector<8x1xf32> to vector<8x8xf32>
    %68 = arith.divf %64, %67 : vector<8x8xf32>
    %c0_39 = arith.constant 0 : index
    %c1 = arith.constant 1 : index
    %c0_40 = arith.constant 0 : index
    %c0_41 = arith.constant 0 : index
    %69 = vector.load %arg15[%c0_39, %c1, %c0_40, %c0_41] : memref<1x4x8x8xf32, #tpu.memory_space<vmem>>, vector<1x1x8x8xf32>
    %70 = vector.shape_cast %69 : vector<1x1x8x8xf32> to vector<8x8xf32>
    %71 = vector.shape_cast %68 : vector<8x8xf32> to vector<1x1x8x8xf32>
    tpu.vector_store %arg15[%c0_39, %c1, %c0_40, %c0_41], %71 {strides = array<i32>} : memref<1x4x8x8xf32, #tpu.memory_space<vmem>>, vector<1x1x8x8xf32>,
    %72 = arith.truncf %68 : vector<8x8xf32> to vector<8x8xbf16>
    %cst_42 = arith.constant dense<0.000000e+00> : vector<8x8xf32>
    %73 = tpu.matmul %72, %56, %cst_42 {dimension_numbers = #tpu.dot_dimension_numbers<[1], [0], [0], [1], [0, 0, 1, 1], [], []>} : vector<8x8xbf16>, vector<8x8xbf16>, vector<8x8xf32> -> vector<8x8xf32>
    %c0_43 = arith.constant 0 : index
    %c8 = arith.constant 8 : index
    %74 = vector.load %arg17[%c0_43, %c8] : memref<8x32xf32, #tpu.memory_space<vmem>>, vector<8x8xf32>
    tpu.vector_store %arg17[%c0_43, %c8], %73 {strides = array<i32>} : memref<8x32xf32, #tpu.memory_space<vmem>>, vector<8x8xf32>,
    %75 = vector.extract_strided_slice %22 {offsets = [0, 16], sizes = [8, 8], strides = [1, 1]} : vector<8x32xf32> to vector<8x8xf32>
    %76 = arith.truncf %75 : vector<8x8xf32> to vector<8x8xbf16>
    %77 = vector.extract_strided_slice %15 {offsets = [0, 16], sizes = [8, 8], strides = [1, 1]} : vector<8x32xf32> to vector<8x8xf32>
    %78 = arith.truncf %77 : vector<8x8xf32> to vector<8x8xbf16>
    %79 = vector.extract_strided_slice %20 {offsets = [0, 16], sizes = [8, 8], strides = [1, 1]} : vector<8x32xf32> to vector<8x8xf32>
    %80 = arith.truncf %79 : vector<8x8xf32> to vector<8x8xbf16>
    %cst_44 = arith.constant dense<0.000000e+00> : vector<8x8xf32>
    %81 = tpu.matmul %76, %78, %cst_44 {dimension_numbers = #tpu.dot_dimension_numbers<[1], [1], [0], [0], [0, 0, 1, 0], [], []>} : vector<8x8xbf16>, vector<8x8xbf16>, vector<8x8xf32> -> vector<8x8xf32>
    %cst_45 = arith.constant -1.000000e+09 : f32
    %82 = vector.broadcast %cst_45 : f32 to vector<8x8xf32>
    %83 = arith.select %26, %81, %82 : vector<8x8xi1>, vector<8x8xf32>
    %cst_46 = arith.constant dense<0xFF800000> : vector<8xf32>
    %84 = vector.multi_reduction <maximumf>, %83, %cst_46 [1] : vector<8x8xf32> to vector<8xf32>
    %85 = vector.shape_cast %84 : vector<8xf32> to vector<8x1xf32>
    %86 = vector.broadcast %85 : vector<8x1xf32> to vector<8x8xf32>
    %87 = arith.subf %83, %86 : vector<8x8xf32>
    %88 = math.exp %87 : vector<8x8xf32>
    %cst_47 = arith.constant dense<0.000000e+00> : vector<8xf32>
    %89 = vector.multi_reduction <add>, %88, %cst_47 [1] : vector<8x8xf32> to vector<8xf32>
    %90 = vector.shape_cast %89 : vector<8xf32> to vector<8x1xf32>
    %91 = vector.broadcast %90 : vector<8x1xf32> to vector<8x8xf32>
    %92 = arith.divf %88, %91 : vector<8x8xf32>
    %c0_48 = arith.constant 0 : index
    %c2 = arith.constant 2 : index
    %c0_49 = arith.constant 0 : index
    %c0_50 = arith.constant 0 : index
    %93 = vector.load %arg15[%c0_48, %c2, %c0_49, %c0_50] : memref<1x4x8x8xf32, #tpu.memory_space<vmem>>, vector<1x1x8x8xf32>
    %94 = vector.shape_cast %93 : vector<1x1x8x8xf32> to vector<8x8xf32>
    %95 = vector.shape_cast %92 : vector<8x8xf32> to vector<1x1x8x8xf32>
    tpu.vector_store %arg15[%c0_48, %c2, %c0_49, %c0_50], %95 {strides = array<i32>} : memref<1x4x8x8xf32, #tpu.memory_space<vmem>>, vector<1x1x8x8xf32>,
    %96 = arith.truncf %92 : vector<8x8xf32> to vector<8x8xbf16>
    %cst_51 = arith.constant dense<0.000000e+00> : vector<8x8xf32>
    %97 = tpu.matmul %96, %80, %cst_51 {dimension_numbers = #tpu.dot_dimension_numbers<[1], [0], [0], [1], [0, 0, 1, 1], [], []>} : vector<8x8xbf16>, vector<8x8xbf16>, vector<8x8xf32> -> vector<8x8xf32>
    %c0_52 = arith.constant 0 : index
    %c16 = arith.constant 16 : index
    %98 = vector.load %arg17[%c0_52, %c16] : memref<8x32xf32, #tpu.memory_space<vmem>>, vector<8x8xf32>
    tpu.vector_store %arg17[%c0_52, %c16], %97 {strides = array<i32>} : memref<8x32xf32, #tpu.memory_space<vmem>>, vector<8x8xf32>,
    %99 = vector.extract_strided_slice %22 {offsets = [0, 24], sizes = [8, 8], strides = [1, 1]} : vector<8x32xf32> to vector<8x8xf32>
    %100 = arith.truncf %99 : vector<8x8xf32> to vector<8x8xbf16>
    %101 = vector.extract_strided_slice %15 {offsets = [0, 24], sizes = [8, 8], strides = [1, 1]} : vector<8x32xf32> to vector<8x8xf32>
    %102 = arith.truncf %101 : vector<8x8xf32> to vector<8x8xbf16>
    %103 = vector.extract_strided_slice %20 {offsets = [0, 24], sizes = [8, 8], strides = [1, 1]} : vector<8x32xf32> to vector<8x8xf32>
    %104 = arith.truncf %103 : vector<8x8xf32> to vector<8x8xbf16>
    %cst_53 = arith.constant dense<0.000000e+00> : vector<8x8xf32>
    %105 = tpu.matmul %100, %102, %cst_53 {dimension_numbers = #tpu.dot_dimension_numbers<[1], [1], [0], [0], [0, 0, 1, 0], [], []>} : vector<8x8xbf16>, vector<8x8xbf16>, vector<8x8xf32> -> vector<8x8xf32>
    %cst_54 = arith.constant -1.000000e+09 : f32
    %106 = vector.broadcast %cst_54 : f32 to vector<8x8xf32>
    %107 = arith.select %26, %105, %106 : vector<8x8xi1>, vector<8x8xf32>
    %cst_55 = arith.constant dense<0xFF800000> : vector<8xf32>
    %108 = vector.multi_reduction <maximumf>, %107, %cst_55 [1] : vector<8x8xf32> to vector<8xf32>
    %109 = vector.shape_cast %108 : vector<8xf32> to vector<8x1xf32>
    %110 = vector.broadcast %109 : vector<8x1xf32> to vector<8x8xf32>
    %111 = arith.subf %107, %110 : vector<8x8xf32>
    %112 = math.exp %111 : vector<8x8xf32>
    %cst_56 = arith.constant dense<0.000000e+00> : vector<8xf32>
    %113 = vector.multi_reduction <add>, %112, %cst_56 [1] : vector<8x8xf32> to vector<8xf32>
    %114 = vector.shape_cast %113 : vector<8xf32> to vector<8x1xf32>
    %115 = vector.broadcast %114 : vector<8x1xf32> to vector<8x8xf32>
    %116 = arith.divf %112, %115 : vector<8x8xf32>
    %c0_57 = arith.constant 0 : index
    %c3 = arith.constant 3 : index
    %c0_58 = arith.constant 0 : index
    %c0_59 = arith.constant 0 : index
    %117 = vector.load %arg15[%c0_57, %c3, %c0_58, %c0_59] : memref<1x4x8x8xf32, #tpu.memory_space<vmem>>, vector<1x1x8x8xf32>
    %118 = vector.shape_cast %117 : vector<1x1x8x8xf32> to vector<8x8xf32>
    %119 = vector.shape_cast %116 : vector<8x8xf32> to vector<1x1x8x8xf32>
    tpu.vector_store %arg15[%c0_57, %c3, %c0_58, %c0_59], %119 {strides = array<i32>} : memref<1x4x8x8xf32, #tpu.memory_space<vmem>>, vector<1x1x8x8xf32>,
    %120 = arith.truncf %116 : vector<8x8xf32> to vector<8x8xbf16>
    %cst_60 = arith.constant dense<0.000000e+00> : vector<8x8xf32>
    %121 = tpu.matmul %120, %104, %cst_60 {dimension_numbers = #tpu.dot_dimension_numbers<[1], [0], [0], [1], [0, 0, 1, 1], [], []>} : vector<8x8xbf16>, vector<8x8xbf16>, vector<8x8xf32> -> vector<8x8xf32>
    %c0_61 = arith.constant 0 : index
    %c24 = arith.constant 24 : index
    %122 = vector.load %arg17[%c0_61, %c24] : memref<8x32xf32, #tpu.memory_space<vmem>>, vector<8x8xf32>
    tpu.vector_store %arg17[%c0_61, %c24], %121 {strides = array<i32>} : memref<8x32xf32, #tpu.memory_space<vmem>>, vector<8x8xf32>,
    %c0_62 = arith.constant 0 : index
    %c0_63 = arith.constant 0 : index
    %123 = vector.load %arg17[%c0_62, %c0_63] : memref<8x32xf32, #tpu.memory_space<vmem>>, vector<8x32xf32>
    %124 = arith.truncf %123 : vector<8x32xf32> to vector<8x32xbf16>
    %c0_64 = arith.constant 0 : index
    %c0_65 = arith.constant 0 : index
    %125 = vector.load %arg11[%c0_64, %c0_65] : memref<32x32xbf16, #tpu.memory_space<vmem>>, vector<32x32xbf16>
    %cst_66 = arith.constant dense<0.000000e+00> : vector<8x32xf32>
    %126 = tpu.matmul %124, %125, %cst_66 {dimension_numbers = #tpu.dot_dimension_numbers<[1], [0], [0], [1], [0, 0, 1, 1], [], []>} : vector<8x32xbf16>, vector<32x32xbf16>, vector<8x32xf32> -> vector<8x32xf32>
    %c0_67 = arith.constant 0 : index
    %c0_68 = arith.constant 0 : index
    %127 = vector.load %arg12[%c0_67, %c0_68] : memref<1x32xf32, #tpu.memory_space<vmem>>, vector<1x32xf32>
    %128 = vector.broadcast %127 : vector<1x32xf32> to vector<8x32xf32>
    %129 = arith.addf %126, %128 : vector<8x32xf32>
    %130 = arith.addf %1, %129 : vector<8x32xf32>
    %cst_69 = arith.constant dense<0.000000e+00> : vector<8xf32>
    %131 = vector.multi_reduction <add>, %130, %cst_69 [1] : vector<8x32xf32> to vector<8xf32>
    %132 = vector.shape_cast %131 : vector<8xf32> to vector<8x1xf32>
    %cst_70 = arith.constant 3.200000e+01 : f32
    %133 = vector.broadcast %cst_70 : f32 to vector<8x1xf32>
    %134 = arith.divf %132, %133 : vector<8x1xf32>
    %135 = vector.broadcast %134 : vector<8x1xf32> to vector<8x32xf32>
    %136 = arith.subf %130, %135 : vector<8x32xf32>
    %137 = arith.mulf %136, %136 : vector<8x32xf32>
    %cst_71 = arith.constant dense<0.000000e+00> : vector<8xf32>
    %138 = vector.multi_reduction <add>, %137, %cst_71 [1] : vector<8x32xf32> to vector<8xf32>
    %139 = vector.shape_cast %138 : vector<8xf32> to vector<8x1xf32>
    %cst_72 = arith.constant 3.200000e+01 : f32
    %140 = vector.broadcast %cst_72 : f32 to vector<8x1xf32>
    %141 = arith.divf %139, %140 : vector<8x1xf32>
    %142 = vector.broadcast %134 : vector<8x1xf32> to vector<8x32xf32>
    %143 = arith.subf %130, %142 : vector<8x32xf32>
    %cst_73 = arith.constant 9.99999974E-6 : f32
    %144 = vector.broadcast %cst_73 : f32 to vector<8x1xf32>
    %145 = arith.addf %141, %144 : vector<8x1xf32>
    %146 = math.rsqrt %145 : vector<8x1xf32>
    %147 = vector.broadcast %146 : vector<8x1xf32> to vector<8x32xf32>
    %148 = arith.mulf %143, %147 : vector<8x32xf32>
    %c0_74 = arith.constant 0 : index
    %c0_75 = arith.constant 0 : index
    %149 = vector.load %arg13[%c0_74, %c0_75] : memref<1x32xf32, #tpu.memory_space<vmem>>, vector<1x32xf32>
    %150 = vector.broadcast %149 : vector<1x32xf32> to vector<8x32xf32>
    %151 = arith.mulf %148, %150 : vector<8x32xf32>
    %c0_76 = arith.constant 0 : index
    %c0_77 = arith.constant 0 : index
    %152 = vector.load %arg14[%c0_76, %c0_77] : memref<1x32xf32, #tpu.memory_space<vmem>>, vector<1x32xf32>
    %153 = vector.broadcast %152 : vector<1x32xf32> to vector<8x32xf32>
    %154 = arith.addf %151, %153 : vector<8x32xf32>
    %c0_78 = arith.constant 0 : index
    %c0_79 = arith.constant 0 : index
    %c0_80 = arith.constant 0 : index
    %155 = vector.load %arg16[%c0_78, %c0_79, %c0_80] : memref<1x8x32xf32, #tpu.memory_space<vmem>>, vector<1x8x32xf32>
    %156 = vector.shape_cast %155 : vector<1x8x32xf32> to vector<8x32xf32>
    %157 = vector.shape_cast %154 : vector<8x32xf32> to vector<1x8x32xf32>
    tpu.vector_store %arg16[%c0_78, %c0_79, %c0_80], %157 {strides = array<i32>} : memref<1x8x32xf32, #tpu.memory_space<vmem>>, vector<1x8x32xf32>,
    return
  }
  func.func @transform_0(%arg0: i32, %arg1: i32) -> (i32, i32, i32) {
    %c0_i32 = arith.constant 0 : i32
    %c0_i32_0 = arith.constant 0 : i32
    return %arg0, %arg1, %c0_i32 : i32, i32, i32
  }
  func.func @transform_1(%arg0: i32, %arg1: i32) -> (i32, i32, i32) {
    %c0_i32 = arith.constant 0 : i32
    %c0_i32_0 = arith.constant 0 : i32
    %c0_i32_1 = arith.constant 0 : i32
    return %arg0, %c0_i32, %c0_i32_0 : i32, i32, i32
  }
  func.func @transform_2(%arg0: i32, %arg1: i32) -> (i32, i32, i32) {
    %c0_i32 = arith.constant 0 : i32
    %c0_i32_0 = arith.constant 0 : i32
    return %arg0, %arg1, %c0_i32 : i32, i32, i32
  }
  func.func @transform_3(%arg0: i32, %arg1: i32) -> (i32, i32) {
    %c0_i32 = arith.constant 0 : i32
    %c0_i32_0 = arith.constant 0 : i32
    %c0_i32_1 = arith.constant 0 : i32
    return %c0_i32, %c0_i32_0 : i32, i32
  }
  func.func @transform_4(%arg0: i32, %arg1: i32) -> (i32, i32) {
    %c0_i32 = arith.constant 0 : i32
    %c0_i32_0 = arith.constant 0 : i32
    %c0_i32_1 = arith.constant 0 : i32
    return %c0_i32, %c0_i32_0 : i32, i32
  }
  func.func @transform_5(%arg0: i32, %arg1: i32) -> (i32, i32) {
    %c0_i32 = arith.constant 0 : i32
    %c0_i32_0 = arith.constant 0 : i32
    %c0_i32_1 = arith.constant 0 : i32
    return %c0_i32, %c0_i32_0 : i32, i32
  }
  func.func @transform_6(%arg0: i32, %arg1: i32) -> (i32, i32) {
    %c0_i32 = arith.constant 0 : i32
    %c0_i32_0 = arith.constant 0 : i32
    %c0_i32_1 = arith.constant 0 : i32
    return %c0_i32, %c0_i32_0 : i32, i32
  }
  func.func @transform_7(%arg0: i32, %arg1: i32) -> (i32, i32) {
    %c0_i32 = arith.constant 0 : i32
    %c0_i32_0 = arith.constant 0 : i32
    %c0_i32_1 = arith.constant 0 : i32
    return %c0_i32, %c0_i32_0 : i32, i32
  }
  func.func @transform_8(%arg0: i32, %arg1: i32) -> (i32, i32) {
    %c0_i32 = arith.constant 0 : i32
    %c0_i32_0 = arith.constant 0 : i32
    %c0_i32_1 = arith.constant 0 : i32
    return %c0_i32, %c0_i32_0 : i32, i32
  }
  func.func @transform_9(%arg0: i32, %arg1: i32) -> (i32, i32) {
    %c0_i32 = arith.constant 0 : i32
    %c0_i32_0 = arith.constant 0 : i32
    %c0_i32_1 = arith.constant 0 : i32
    return %c0_i32, %c0_i32_0 : i32, i32
  }
  func.func @transform_10(%arg0: i32, %arg1: i32) -> (i32, i32) {
    %c0_i32 = arith.constant 0 : i32
    %c0_i32_0 = arith.constant 0 : i32
    %c0_i32_1 = arith.constant 0 : i32
    return %c0_i32, %c0_i32_0 : i32, i32
  }
  func.func @transform_11(%arg0: i32, %arg1: i32) -> (i32, i32) {
    %c0_i32 = arith.constant 0 : i32
    %c0_i32_0 = arith.constant 0 : i32
    %c0_i32_1 = arith.constant 0 : i32
    return %c0_i32, %c0_i32_0 : i32, i32
  }
  func.func @transform_12(%arg0: i32, %arg1: i32) -> (i32, i32) {
    %c0_i32 = arith.constant 0 : i32
    %c0_i32_0 = arith.constant 0 : i32
    %c0_i32_1 = arith.constant 0 : i32
    return %c0_i32, %c0_i32_0 : i32, i32
  }
  func.func @transform_13(%arg0: i32, %arg1: i32) -> (i32, i32, i32, i32) {
    %c0_i32 = arith.constant 0 : i32
    %c0_i32_0 = arith.constant 0 : i32
    %c0_i32_1 = arith.constant 0 : i32
    return %arg0, %c0_i32, %arg1, %c0_i32_0 : i32, i32, i32, i32
  }
  func.func @transform_14(%arg0: i32, %arg1: i32) -> (i32, i32, i32) {
    %c0_i32 = arith.constant 0 : i32
    %c0_i32_0 = arith.constant 0 : i32
    return %arg0, %arg1, %c0_i32 : i32, i32, i32
  }
}

</mosaic_0001>

<llo_original>
// kernel: tpu_custom_call.1
$region0: #{tpu_custom_call.1}
  #allocation0 [shape = 'u32[]', space=smem, size = 0x4, offset = 0x4, fixed_abs, tag = 'smem constant byte address 0x4 - core index']
  #allocation1 [shape = 'u32[144,128]{1,0:T(1,128)}', space=vmem, size = 0x12000, scoped, tag = 'internal scratch']
  #allocation2 [shape = 'f32[8,32]{1,0:T(8,128)}', space=vmem, size = 0x1000, scoped, tag = 'scratch operand']
  %s0 = inlined_call_operand.hbm [shape: f32[2,8,32], index: 0, kind: input, shape index: {}]
  %s1 = inlined_call_operand.hbm [shape: f32[2,8,32], index: 1, kind: input, shape index: {}]
  %s2 = inlined_call_operand.hbm [shape: bf16[2,8,8], index: 2, kind: input, shape index: {}]
  %s3 = inlined_call_operand.hbm [shape: bf16[32,32], index: 3, kind: input, shape index: {}]
  %s4 = inlined_call_operand.vmem [shape: f32[1,32], index: 4, kind: input, shape index: {}]
  %s5 = inlined_call_operand.vmem [shape: bf16[32,32], index: 5, kind: input, shape index: {}]
  %s6 = inlined_call_operand.vmem [shape: f32[1,32], index: 6, kind: input, shape index: {}]
  %s7 = inlined_call_operand.hbm [shape: bf16[32,32], index: 7, kind: input, shape index: {}]
  %s8 = inlined_call_operand.hbm [shape: f32[1,32], index: 8, kind: input, shape index: {}]
  %s9 = inlined_call_operand.vmem [shape: bf16[32,32], index: 9, kind: input, shape index: {}]
  %s10 = inlined_call_operand.vmem [shape: f32[1,32], index: 10, kind: input, shape index: {}]
  %s11 = inlined_call_operand.vmem [shape: f32[1,32], index: 11, kind: input, shape index: {}]
  %s12 = inlined_call_operand.vmem [shape: f32[1,32], index: 12, kind: input, shape index: {}]
  %s13 = inlined_call_operand.hbm [shape: f32[2,4,8,8], index: 13, kind: output, shape index: {0}]
  %s14 = inlined_call_operand.hbm [shape: f32[2,8,32], index: 14, kind: output, shape index: {1}]
  %15 = xla_tuple %s13, %s14
  %s16 = sld [smem:[#allocation0]]
  $region117: #{tpu_custom_call.1} parent=0
    _
  %s18 = ssub.s32 1, %s16
  %s19 = scalar_select 0, %s18, %s16
  $region1: #{tpu_custom_call.1} parent=0
    #allocation3 [shape = 'u8[8192]{0}', space=vmem, size = 0x2000, scoped, tag = 'input window, operand 0']
    #allocation4 [shape = 's32[2]{0}', space=sflag, size = 0x8, scoped, tag = 'scoped memory for tpu_custom_call.1']
    #allocation5 [shape = 's32[2]{0}', space=sflag, size = 0x8, scoped, tag = 'scoped memory for tpu_custom_call.1']
    #allocation6 [shape = 'u8[8192]{0}', space=vmem, size = 0x2000, scoped, tag = 'input window, operand 1']
    #allocation7 [shape = 's32[2]{0}', space=sflag, size = 0x8, scoped, tag = 'scoped memory for tpu_custom_call.1']
    #allocation8 [shape = 'u8[4096]{0}', space=vmem, size = 0x1000, scoped, tag = 'input window, operand 2']
    #allocation9 [shape = 'u8[8192]{0}', space=vmem, size = 0x2000, scoped, tag = 'input window, operand 3, single buffered']
    #allocation10 [shape = 's32[1]{0}', space=sflag, size = 0x4, scoped, tag = 'scoped memory for tpu_custom_call.1']
    #allocation11 [shape = 'u8[8192]{0}', space=vmem, size = 0x2000, scoped, tag = 'input window, operand 7, single buffered']
    #allocation12 [shape = 'u8[512]{0}', space=vmem, size = 0x400, scoped, tag = 'input window, operand 8, single buffered']
    #allocation13 [shape = 's32[1]{0}', space=sflag, size = 0x4, scoped, tag = 'scoped memory for tpu_custom_call.1']
    #allocation14 [shape = 'u8[32768]{0}', space=vmem, size = 0x8000, scoped, tag = 'output window, operand 0']
    #allocation15 [shape = 'u8[8192]{0}', space=vmem, size = 0x2000, scoped, tag = 'output window, operand 1']
    #allocation16 [shape = 's32[2]{0}', space=sflag, size = 0x8, scoped, tag = 'scoped memory for tpu_custom_call.1']
    %20 = vsyncpa [#allocation4], 0
    %s21 = scalar_lea.sflag [#allocation4], 1
    %22 = vsyncpa %s21, 0
    %23 = vsyncpa [#allocation7], 0
    %s24 = scalar_lea.sflag [#allocation7], 1
    %25 = vsyncpa %s24, 0
    %26 = vsyncpa [#allocation10], 0
    %27 = vsyncpa [#allocation13], 0
    %28 = vsyncpa [#allocation5], 0
    %s29 = scalar_lea.sflag [#allocation5], 1
    %30 = vsyncpa %s29, 0
    %31 = vsyncpa [#allocation16], 0
    %s32 = scalar_lea.sflag [#allocation16], 1
    %33 = vsyncpa %s32, 0
    loop: start=0, step=1, limit=4
    $region2: #{tpu_custom_call.1} parent=1 // loop_pre_header
      _
    $region3: #{tpu_custom_call.1} parent=1 // loop_header
      %s35 = sphi 0, %s39
      %p36 = scmp.ge.s32.totalorder %s35, 4
      %s42 = sphi 0, %s54
      %s43 = sphi 0, %s50
      %s44 = sphi 0, %s42
      %s45 = sphi 0, %s43
      %s46 = sphi 0, %s44
      %s47 = sphi 0, %s45
      %s59 = sphi 0, %s61
      %s62 = sphi 0, %s59
      %s63 = sphi 0, %s62
      %s79 = sphi 0, %s63
      %s85 = sphi 0, %s87
      %s88 = sphi 0, %s85
      %s89 = sphi 0, %s88
      %s105 = sphi 0, %s89
      %s113 = sphi 0, %s115
      %s116 = sphi 0, %s113
      %s117 = sphi 0, %s116
      %s133 = sphi 0, %s117
      %s137 = sphi 0, %s137
      %s139 = sphi 0, %s137
      %s140 = sphi 0, %s139
      %s154 = sphi 0, %s140
      %s158 = sphi 0, %s158
      %s160 = sphi 0, %s158
      %s161 = sphi 0, %s160
      %s175 = sphi 0, %s161
      %s179 = sphi 0, %s179
      %s181 = sphi 0, %s179
      %s182 = sphi 0, %s181
      %s196 = sphi 0, %s182
      %s200 = sphi 0, %s200
      %s202 = sphi 0, %s200
      %s203 = sphi 0, %s202
      %s217 = sphi 0, %s203
      %s221 = sphi 0, %s221
      %s223 = sphi 0, %s221
      %s224 = sphi 0, %s223
      %s238 = sphi 0, %s224
      %s242 = sphi 0, %s242
      %s244 = sphi 0, %s242
      %s245 = sphi 0, %s244
      %s259 = sphi 0, %s245
      %s263 = sphi 0, %s263
      %s265 = sphi 0, %s263
      %s266 = sphi 0, %s265
      %s280 = sphi 0, %s266
      %s284 = sphi 0, %s284
      %s286 = sphi 0, %s284
      %s287 = sphi 0, %s286
      %s301 = sphi 0, %s287
      %s305 = sphi 0, %s305
      %s307 = sphi 0, %s305
      %s308 = sphi 0, %s307
      %s322 = sphi 0, %s308
      %s326 = sphi 0, %s326
      %s328 = sphi 0, %s326
      %s329 = sphi 0, %s328
      %s343 = sphi 0, %s329
      %s351 = sphi 0, %s353
      %s354 = sphi 0, %s351
      %s355 = sphi 0, %s354
      %s371 = sphi 0, %s355
      %s379 = sphi 0, %s381
      %s382 = sphi 0, %s379
      %s383 = sphi 0, %s382
      %s399 = sphi 0, %s383
    $region4: #{tpu_custom_call.1} parent=1 // loop_header_branch
      %38 = sbr.rel (%p36) target = $region8
    $region5: #{tpu_custom_call.1} parent=1 // loop_body
      %s40 = ssub.s32 %s35, 1
      %s41 = ssub.s32 %s35, 2
      %s48 = sadd.s32 1, %s43
      %p49 = scmp.ge.s32.totalorder %s48, 1
      %s50 = scalar_select %p49, 0, %s48
      %s51 = sadd.s32 1, %s42
      %s52 = scalar_select %p49, %s51, %s42
      %p53 = scmp.ge.s32.totalorder %s52, 2
      %s54 = scalar_select %p53, 0, %s52
      %s55 = ssub.s32 %s42, %s54
      %s56 = ssub.s32 %s43, %s50
      %s57 = sor.u32 %s55, %s56
      %p58 = scmp.eq.s32.totalorder %s57, 0
      %s60 = sadd.s32 %s59, 1
      %s61 = scalar_select %p58, %s59, %s60
      %p64 = pneg %p58
      %p65 = scmp.eq.s32.totalorder %s35, 1
      %p66 = por %p64, %p65
      %p67 = scmp.ne.s32.totalorder %s59, %s62
      %p68 = scmp.eq.s32.totalorder %s35, 0
      %p69 = por %p67, %p68
      %p70 = scmp.ne.s32.totalorder %s59, %s62
      %p71 = scmp.eq.s32.totalorder %s40, 1
      %p72 = por %p70, %p71
      %p73 = scmp.ne.s32.totalorder %s62, %s63
      %p74 = scmp.eq.s32.totalorder %s40, 0
      %p75 = por %p73, %p74
      %p76 = scmp.ne.s32.totalorder %s62, %s63
      %p77 = scmp.eq.s32.totalorder %s41, 1
      %p78 = por %p76, %p77
      %p80 = scmp.ne.s32.totalorder %s63, %s79
      %p81 = scmp.eq.s32.totalorder %s41, 0
      %p82 = por %p80, %p81
      %s83 = ssub.s32 %s42, %s54
      %p84 = scmp.eq.s32.totalorder %s83, 0
      %s86 = sadd.s32 %s85, 1
      %s87 = scalar_select %p84, %s85, %s86
      %p90 = pneg %p84
      %p91 = scmp.eq.s32.totalorder %s35, 1
      %p92 = por %p90, %p91
      %p93 = scmp.ne.s32.totalorder %s85, %s88
      %p94 = scmp.eq.s32.totalorder %s35, 0
      %p95 = por %p93, %p94
      %p96 = scmp.ne.s32.totalorder %s85, %s88
      %p97 = scmp.eq.s32.totalorder %s40, 1
      %p98 = por %p96, %p97
      %p99 = scmp.ne.s32.totalorder %s88, %s89
      %p100 = scmp.eq.s32.totalorder %s40, 0
      %p101 = por %p99, %p100
      %p102 = scmp.ne.s32.totalorder %s88, %s89
      %p103 = scmp.eq.s32.totalorder %s41, 1
      %p104 = por %p102, %p103
      %p106 = scmp.ne.s32.totalorder %s89, %s105
      %p107 = scmp.eq.s32.totalorder %s41, 0
      %p108 = por %p106, %p107
      %s109 = ssub.s32 %s42, %s54
      %s110 = ssub.s32 %s43, %s50
      %s111 = sor.u32 %s109, %s110
      %p112 = scmp.eq.s32.totalorder %s111, 0
      %s114 = sadd.s32 %s113, 1
      %s115 = scalar_select %p112, %s113, %s114
      %p118 = pneg %p112
      %p119 = scmp.eq.s32.totalorder %s35, 1
      %p120 = por %p118, %p119
      %p121 = scmp.ne.s32.totalorder %s113, %s116
      %p122 = scmp.eq.s32.totalorder %s35, 0
      %p123 = por %p121, %p122
      %p124 = scmp.ne.s32.totalorder %s113, %s116
      %p125 = scmp.eq.s32.totalorder %s40, 1
      %p126 = por %p124, %p125
      %p127 = scmp.ne.s32.totalorder %s116, %s117
      %p128 = scmp.eq.s32.totalorder %s40, 0
      %p129 = por %p127, %p128
      %p130 = scmp.ne.s32.totalorder %s116, %s117
      %p131 = scmp.eq.s32.totalorder %s41, 1
      %p132 = por %p130, %p131
      %p134 = scmp.ne.s32.totalorder %s117, %s133
      %p135 = scmp.eq.s32.totalorder %s41, 0
      %p136 = por %p134, %p135
      %s138 = sadd.s32 %s137, 1
      %p141 = scmp.eq.s32.totalorder %s35, 1
      %p142 = scmp.ne.s32.totalorder %s137, %s139
      %p143 = scmp.eq.s32.totalorder %s35, 0
      %p144 = por %p142, %p143
      %p145 = scmp.ne.s32.totalorder %s137, %s139
      %p146 = scmp.eq.s32.totalorder %s40, 1
      %p147 = por %p145, %p146
      %p148 = scmp.ne.s32.totalorder %s139, %s140
      %p149 = scmp.eq.s32.totalorder %s40, 0
      %p150 = por %p148, %p149
      %p151 = scmp.ne.s32.totalorder %s139, %s140
      %p152 = scmp.eq.s32.totalorder %s41, 1
      %p153 = por %p151, %p152
      %p155 = scmp.ne.s32.totalorder %s140, %s154
      %p156 = scmp.eq.s32.totalorder %s41, 0
      %p157 = por %p155, %p156
      %s159 = sadd.s32 %s158, 1
      %p162 = scmp.eq.s32.totalorder %s35, 1
      %p163 = scmp.ne.s32.totalorder %s158, %s160
      %p164 = scmp.eq.s32.totalorder %s35, 0
      %p165 = por %p163, %p164
      %p166 = scmp.ne.s32.totalorder %s158, %s160
      %p167 = scmp.eq.s32.totalorder %s40, 1
      %p168 = por %p166, %p167
      %p169 = scmp.ne.s32.totalorder %s160, %s161
      %p170 = scmp.eq.s32.totalorder %s40, 0
      %p171 = por %p169, %p170
      %p172 = scmp.ne.s32.totalorder %s160, %s161
      %p173 = scmp.eq.s32.totalorder %s41, 1
      %p174 = por %p172, %p173
      %p176 = scmp.ne.s32.totalorder %s161, %s175
      %p177 = scmp.eq.s32.totalorder %s41, 0
      %p178 = por %p176, %p177
      %s180 = sadd.s32 %s179, 1
      %p183 = scmp.eq.s32.totalorder %s35, 1
      %p184 = scmp.ne.s32.totalorder %s179, %s181
      %p185 = scmp.eq.s32.totalorder %s35, 0
      %p186 = por %p184, %p185
      %p187 = scmp.ne.s32.totalorder %s179, %s181
      %p188 = scmp.eq.s32.totalorder %s40, 1
      %p189 = por %p187, %p188
      %p190 = scmp.ne.s32.totalorder %s181, %s182
      %p191 = scmp.eq.s32.totalorder %s40, 0
      %p192 = por %p190, %p191
      %p193 = scmp.ne.s32.totalorder %s181, %s182
      %p194 = scmp.eq.s32.totalorder %s41, 1
      %p195 = por %p193, %p194
      %p197 = scmp.ne.s32.totalorder %s182, %s196
      %p198 = scmp.eq.s32.totalorder %s41, 0
      %p199 = por %p197, %p198
      %s201 = sadd.s32 %s200, 1
      %p204 = scmp.eq.s32.totalorder %s35, 1
      %p205 = scmp.ne.s32.totalorder %s200, %s202
      %p206 = scmp.eq.s32.totalorder %s35, 0
      %p207 = por %p205, %p206
      %p208 = scmp.ne.s32.totalorder %s200, %s202
      %p209 = scmp.eq.s32.totalorder %s40, 1
      %p210 = por %p208, %p209
      %p211 = scmp.ne.s32.totalorder %s202, %s203
      %p212 = scmp.eq.s32.totalorder %s40, 0
      %p213 = por %p211, %p212
      %p214 = scmp.ne.s32.totalorder %s202, %s203
      %p215 = scmp.eq.s32.totalorder %s41, 1
      %p216 = por %p214, %p215
      %p218 = scmp.ne.s32.totalorder %s203, %s217
      %p219 = scmp.eq.s32.totalorder %s41, 0
      %p220 = por %p218, %p219
      %s222 = sadd.s32 %s221, 1
      %p225 = scmp.eq.s32.totalorder %s35, 1
      %p226 = scmp.ne.s32.totalorder %s221, %s223
      %p227 = scmp.eq.s32.totalorder %s35, 0
      %p228 = por %p226, %p227
      %p229 = scmp.ne.s32.totalorder %s221, %s223
      %p230 = scmp.eq.s32.totalorder %s40, 1
      %p231 = por %p229, %p230
      %p232 = scmp.ne.s32.totalorder %s223, %s224
      %p233 = scmp.eq.s32.totalorder %s40, 0
      %p234 = por %p232, %p233
      %p235 = scmp.ne.s32.totalorder %s223, %s224
      %p236 = scmp.eq.s32.totalorder %s41, 1
      %p237 = por %p235, %p236
      %p239 = scmp.ne.s32.totalorder %s224, %s238
      %p240 = scmp.eq.s32.totalorder %s41, 0
      %p241 = por %p239, %p240
      %s243 = sadd.s32 %s242, 1
      %p246 = scmp.eq.s32.totalorder %s35, 1
      %p247 = scmp.ne.s32.totalorder %s242, %s244
      %p248 = scmp.eq.s32.totalorder %s35, 0
      %p249 = por %p247, %p248
      %p250 = scmp.ne.s32.totalorder %s242, %s244
      %p251 = scmp.eq.s32.totalorder %s40, 1
      %p252 = por %p250, %p251
      %p253 = scmp.ne.s32.totalorder %s244, %s245
      %p254 = scmp.eq.s32.totalorder %s40, 0
      %p255 = por %p253, %p254
      %p256 = scmp.ne.s32.totalorder %s244, %s245
      %p257 = scmp.eq.s32.totalorder %s41, 1
      %p258 = por %p256, %p257
      %p260 = scmp.ne.s32.totalorder %s245, %s259
      %p261 = scmp.eq.s32.totalorder %s41, 0
      %p262 = por %p260, %p261
      %s264 = sadd.s32 %s263, 1
      %p267 = scmp.eq.s32.totalorder %s35, 1
      %p268 = scmp.ne.s32.totalorder %s263, %s265
      %p269 = scmp.eq.s32.totalorder %s35, 0
      %p270 = por %p268, %p269
      %p271 = scmp.ne.s32.totalorder %s263, %s265
      %p272 = scmp.eq.s32.totalorder %s40, 1
      %p273 = por %p271, %p272
      %p274 = scmp.ne.s32.totalorder %s265, %s266
      %p275 = scmp.eq.s32.totalorder %s40, 0
      %p276 = por %p274, %p275
      %p277 = scmp.ne.s32.totalorder %s265, %s266
      %p278 = scmp.eq.s32.totalorder %s41, 1
      %p279 = por %p277, %p278
      %p281 = scmp.ne.s32.totalorder %s266, %s280
      %p282 = scmp.eq.s32.totalorder %s41, 0
      %p283 = por %p281, %p282
      %s285 = sadd.s32 %s284, 1
      %p288 = scmp.eq.s32.totalorder %s35, 1
      %p289 = scmp.ne.s32.totalorder %s284, %s286
      %p290 = scmp.eq.s32.totalorder %s35, 0
      %p291 = por %p289, %p290
      %p292 = scmp.ne.s32.totalorder %s284, %s286
      %p293 = scmp.eq.s32.totalorder %s40, 1
      %p294 = por %p292, %p293
      %p295 = scmp.ne.s32.totalorder %s286, %s287
      %p296 = scmp.eq.s32.totalorder %s40, 0
      %p297 = por %p295, %p296
      %p298 = scmp.ne.s32.totalorder %s286, %s287
      %p299 = scmp.eq.s32.totalorder %s41, 1
      %p300 = por %p298, %p299
      %p302 = scmp.ne.s32.totalorder %s287, %s301
      %p303 = scmp.eq.s32.totalorder %s41, 0
      %p304 = por %p302, %p303
      %s306 = sadd.s32 %s305, 1
      %p309 = scmp.eq.s32.totalorder %s35, 1
      %p310 = scmp.ne.s32.totalorder %s305, %s307
      %p311 = scmp.eq.s32.totalorder %s35, 0
      %p312 = por %p310, %p311
      %p313 = scmp.ne.s32.totalorder %s305, %s307
      %p314 = scmp.eq.s32.totalorder %s40, 1
      %p315 = por %p313, %p314
      %p316 = scmp.ne.s32.totalorder %s307, %s308
      %p317 = scmp.eq.s32.totalorder %s40, 0
      %p318 = por %p316, %p317
      %p319 = scmp.ne.s32.totalorder %s307, %s308
      %p320 = scmp.eq.s32.totalorder %s41, 1
      %p321 = por %p319, %p320
      %p323 = scmp.ne.s32.totalorder %s308, %s322
      %p324 = scmp.eq.s32.totalorder %s41, 0
      %p325 = por %p323, %p324
      %s327 = sadd.s32 %s326, 1
      %p330 = scmp.eq.s32.totalorder %s35, 1
      %p331 = scmp.ne.s32.totalorder %s326, %s328
      %p332 = scmp.eq.s32.totalorder %s35, 0
      %p333 = por %p331, %p332
      %p334 = scmp.ne.s32.totalorder %s326, %s328
      %p335 = scmp.eq.s32.totalorder %s40, 1
      %p336 = por %p334, %p335
      %p337 = scmp.ne.s32.totalorder %s328, %s329
      %p338 = scmp.eq.s32.totalorder %s40, 0
      %p339 = por %p337, %p338
      %p340 = scmp.ne.s32.totalorder %s328, %s329
      %p341 = scmp.eq.s32.totalorder %s41, 1
      %p342 = por %p340, %p341
      %p344 = scmp.ne.s32.totalorder %s329, %s343
      %p345 = scmp.eq.s32.totalorder %s41, 0
      %p346 = por %p344, %p345
      %s347 = ssub.s32 %s42, %s54
      %s348 = ssub.s32 %s43, %s50
      %s349 = sor.u32 %s347, %s348
      %p350 = scmp.eq.s32.totalorder %s349, 0
      %s352 = sadd.s32 %s351, 1
      %s353 = scalar_select %p350, %s351, %s352
      %p356 = pneg %p350
      %p357 = scmp.eq.s32.totalorder %s35, 1
      %p358 = por %p356, %p357
      %p359 = scmp.ne.s32.totalorder %s351, %s354
      %p360 = scmp.eq.s32.totalorder %s35, 0
      %p361 = por %p359, %p360
      %p362 = scmp.ne.s32.totalorder %s351, %s354
      %p363 = scmp.eq.s32.totalorder %s40, 1
      %p364 = por %p362, %p363
      %p365 = scmp.ne.s32.totalorder %s354, %s355
      %p366 = scmp.eq.s32.totalorder %s40, 0
      %p367 = por %p365, %p366
      %p368 = scmp.ne.s32.totalorder %s354, %s355
      %p369 = scmp.eq.s32.totalorder %s41, 1
      %p370 = por %p368, %p369
      %p372 = scmp.ne.s32.totalorder %s355, %s371
      %p373 = scmp.eq.s32.totalorder %s41, 0
      %p374 = por %p372, %p373
      %s375 = ssub.s32 %s42, %s54
      %s376 = ssub.s32 %s43, %s50
      %s377 = sor.u32 %s375, %s376
      %p378 = scmp.eq.s32.totalorder %s377, 0
      %s380 = sadd.s32 %s379, 1
      %s381 = scalar_select %p378, %s379, %s380
      %p384 = pneg %p378
      %p385 = scmp.eq.s32.totalorder %s35, 1
      %p386 = por %p384, %p385
      %p387 = scmp.ne.s32.totalorder %s379, %s382
      %p388 = scmp.eq.s32.totalorder %s35, 0
      %p389 = por %p387, %p388
      %p390 = scmp.ne.s32.totalorder %s379, %s382
      %p391 = scmp.eq.s32.totalorder %s40, 1
      %p392 = por %p390, %p391
      %p393 = scmp.ne.s32.totalorder %s382, %s383
      %p394 = scmp.eq.s32.totalorder %s40, 0
      %p395 = por %p393, %p394
      %p396 = scmp.ne.s32.totalorder %s382, %s383
      %p397 = scmp.eq.s32.totalorder %s41, 1
      %p398 = por %p396, %p397
      %p400 = scmp.ne.s32.totalorder %s383, %s399
      %p401 = scmp.eq.s32.totalorder %s41, 0
      %p402 = por %p400, %p401
      %p403 = scmp.le.s32.totalorder 1, %s35
      %p404 = scmp.lt.s32.totalorder %s35, 3
      %p405 = pnand %p403, %p404
      %p406 = pneg %p405
      // Predicated region
      $region9: #{tpu_custom_call.1} parent=5 // pred_check
        _
      $region10: #{tpu_custom_call.1} parent=5 // pred_check_branch
        %408 = sbr.rel (%p405) target = $region12
      $region11: #{tpu_custom_call.1} parent=5 // pred_region
        %s409 = ssub.s32 %s35, 1
        // Predicated region
        $region13: #{tpu_custom_call.1} parent=11 // pred_check
          %p410 = pneg %p150
        $region14: #{tpu_custom_call.1} parent=11 // pred_check_branch
          %412 = sbr.rel (%p410) target = $region16
        $region15: #{tpu_custom_call.1} parent=11 // pred_region
          %s414 = ssub.s32 256, 256
          %415 = vsyncadd [#allocation10], %s414
          %s416 = sshll.u32 [#allocation9], 4
          %s417 = int_to_ptr.vmem [resolvable:$true] %s416
          %422 = dma.hbm_to_vmem [thread:$0]  %s3, 256, %s417, [#allocation10], 64, 64, 4
        $region16: #{tpu_custom_call.1} parent=11 // pred_fallthru
          _
        // Predicated region
        $region17: #{tpu_custom_call.1} parent=11 // pred_check
          %p423 = pneg %p171
        $region18: #{tpu_custom_call.1} parent=11 // pred_check_branch
          %425 = sbr.rel (%p423) target = $region20
        $region19: #{tpu_custom_call.1} parent=11 // pred_region
          _
        $region20: #{tpu_custom_call.1} parent=11 // pred_fallthru
          _
        // Predicated region
        $region21: #{tpu_custom_call.1} parent=11 // pred_check
          %p426 = pneg %p192
        $region22: #{tpu_custom_call.1} parent=11 // pred_check_branch
          %428 = sbr.rel (%p426) target = $region24
        $region23: #{tpu_custom_call.1} parent=11 // pred_region
          _
        $region24: #{tpu_custom_call.1} parent=11 // pred_fallthru
          _
        // Predicated region
        $region25: #{tpu_custom_call.1} parent=11 // pred_check
          %p429 = pneg %p213
        $region26: #{tpu_custom_call.1} parent=11 // pred_check_branch
          %431 = sbr.rel (%p429) target = $region28
        $region27: #{tpu_custom_call.1} parent=11 // pred_region
          _
        $region28: #{tpu_custom_call.1} parent=11 // pred_fallthru
          _
        // Predicated region
        $region29: #{tpu_custom_call.1} parent=11 // pred_check
          %p432 = pneg %p234
        $region30: #{tpu_custom_call.1} parent=11 // pred_check_branch
          %434 = sbr.rel (%p432) target = $region32
        $region31: #{tpu_custom_call.1} parent=11 // pred_region
          %s436 = ssub.s32 256, 256
          %437 = vsyncadd [#allocation10], %s436
          %s438 = sshll.u32 [#allocation11], 4
          %s439 = int_to_ptr.vmem [resolvable:$true] %s438
          %444 = dma.hbm_to_vmem [thread:$0]  %s7, 256, %s439, [#allocation10], 64, 64, 4
        $region32: #{tpu_custom_call.1} parent=11 // pred_fallthru
          _
        // Predicated region
        $region33: #{tpu_custom_call.1} parent=11 // pred_check
          %p445 = pneg %p255
        $region34: #{tpu_custom_call.1} parent=11 // pred_check_branch
          %447 = sbr.rel (%p445) target = $region36
        $region35: #{tpu_custom_call.1} parent=11 // pred_region
          %s449 = ssub.s32 16, 16
          %450 = vsyncadd [#allocation13], %s449
          %s452 = sshll.u32 [#allocation12], 4
          %s453 = int_to_ptr.vmem [resolvable:$true] %s452
          %455 = dma.hbm_to_vmem [thread:$0]  %s8, 16, %s453, [#allocation13]
        $region36: #{tpu_custom_call.1} parent=11 // pred_fallthru
          _
        // Predicated region
        $region37: #{tpu_custom_call.1} parent=11 // pred_check
          %p456 = pneg %p276
        $region38: #{tpu_custom_call.1} parent=11 // pred_check_branch
          %458 = sbr.rel (%p456) target = $region40
        $region39: #{tpu_custom_call.1} parent=11 // pred_region
          _
        $region40: #{tpu_custom_call.1} parent=11 // pred_fallthru
          _
        // Predicated region
        $region41: #{tpu_custom_call.1} parent=11 // pred_check
          %p459 = pneg %p297
        $region42: #{tpu_custom_call.1} parent=11 // pred_check_branch
          %461 = sbr.rel (%p459) target = $region44
        $region43: #{tpu_custom_call.1} parent=11 // pred_region
          _
        $region44: #{tpu_custom_call.1} parent=11 // pred_fallthru
          _
        // Predicated region
        $region45: #{tpu_custom_call.1} parent=11 // pred_check
          %p462 = pneg %p318
        $region46: #{tpu_custom_call.1} parent=11 // pred_check_branch
          %464 = sbr.rel (%p462) target = $region48
        $region47: #{tpu_custom_call.1} parent=11 // pred_region
          _
        $region48: #{tpu_custom_call.1} parent=11 // pred_fallthru
          _
        // Predicated region
        $region49: #{tpu_custom_call.1} parent=11 // pred_check
          %p465 = pneg %p339
        $region50: #{tpu_custom_call.1} parent=11 // pred_check_branch
          %467 = sbr.rel (%p465) target = $region52
        $region51: #{tpu_custom_call.1} parent=11 // pred_region
          _
        $region52: #{tpu_custom_call.1} parent=11 // pred_fallthru
          _
      $region12: #{tpu_custom_call.1} parent=5 // pred_fallthru
        _
      %p468 = scmp.lt.s32.totalorder %s35, 2
      // Predicated region
      $region53: #{tpu_custom_call.1} parent=5 // pred_check
        %p469 = pneg %p468
      $region54: #{tpu_custom_call.1} parent=5 // pred_check_branch
        %471 = sbr.rel (%p469) target = $region56
      $region55: #{tpu_custom_call.1} parent=5 // pred_region
        // Predicated region
        $region57: #{tpu_custom_call.1} parent=55 // pred_check
          %p472 = pneg %p69
        $region58: #{tpu_custom_call.1} parent=55 // pred_check_branch
          %474 = sbr.rel (%p472) target = $region60
        $region59: #{tpu_custom_call.1} parent=55 // pred_region
          %s475 = sand.u32 %s59, 1
          %s476 = scalar_lea.sflag [#allocation4], %s475
          %s477 = sand.u32 %s59, 1
          %s478 = smul.addr %s477, 8
          %s479 = scalar_lea.vmem [#allocation3], %s478
          %s481 = ssub.s32 128, 128
          %482 = vsyncadd %s476, %s481
          %s483 = sadd.s32 %s43, %s42
          %s484 = smul.addr %s483, 128
          %s485 = scalar_lea.hbm %s0, %s484
          %s487 = sshll.u32 %s479, 4
          %s488 = int_to_ptr.vmem [resolvable:$true] %s487
          %490 = dma.hbm_to_vmem [thread:$0]  %s485, 128, %s488, %s476
        $region60: #{tpu_custom_call.1} parent=55 // pred_fallthru
          _
        // Predicated region
        $region61: #{tpu_custom_call.1} parent=55 // pred_check
          %p491 = pneg %p95
        $region62: #{tpu_custom_call.1} parent=55 // pred_check_branch
          %493 = sbr.rel (%p491) target = $region64
        $region63: #{tpu_custom_call.1} parent=55 // pred_region
          %s494 = sand.u32 %s35, 1
          %s495 = scalar_lea.sflag [#allocation7], %s494
          %s496 = sand.u32 %s85, 1
          %s497 = smul.addr %s496, 8
          %s498 = scalar_lea.vmem [#allocation6], %s497
          %s500 = ssub.s32 128, 128
          %501 = vsyncadd %s495, %s500
          %s502 = smul.addr %s42, 128
          %s503 = scalar_lea.hbm %s1, %s502
          %s505 = sshll.u32 %s498, 4
          %s506 = int_to_ptr.vmem [resolvable:$true] %s505
          %508 = dma.hbm_to_vmem [thread:$0]  %s503, 128, %s506, %s495
        $region64: #{tpu_custom_call.1} parent=55 // pred_fallthru
          _
        // Predicated region
        $region65: #{tpu_custom_call.1} parent=55 // pred_check
          %p509 = pneg %p123
        $region66: #{tpu_custom_call.1} parent=55 // pred_check_branch
          %511 = sbr.rel (%p509) target = $region68
        $region67: #{tpu_custom_call.1} parent=55 // pred_region
          %s512 = sand.u32 %s35, 1
          %s513 = scalar_lea.sflag [#allocation7], %s512
          %s514 = sand.u32 %s113, 1
          %s515 = smul.addr %s514, 4
          %s516 = scalar_lea.vmem [#allocation8], %s515
          %s518 = ssub.s32 64, 64
          %519 = vsyncadd %s513, %s518
          %s520 = sadd.s32 %s43, %s42
          %s521 = smul.addr %s520, 64
          %s522 = scalar_lea.hbm %s2, %s521
          %s524 = sshll.u32 %s516, 4
          %s525 = int_to_ptr.vmem [resolvable:$true] %s524
          %527 = dma.hbm_to_vmem [thread:$0]  %s522, 64, %s525, %s513
        $region68: #{tpu_custom_call.1} parent=55 // pred_fallthru
          _
      $region56: #{tpu_custom_call.1} parent=5 // pred_fallthru
        _
      %p528 = scmp.le.s32.totalorder 1, %s35
      %p529 = scmp.lt.s32.totalorder %s35, 3
      %p530 = pnand %p528, %p529
      %p531 = pneg %p530
      // Predicated region
      $region69: #{tpu_custom_call.1} parent=5 // pred_check
        _
      $region70: #{tpu_custom_call.1} parent=5 // pred_check_branch
        %533 = sbr.rel (%p530) target = $region72
      $region71: #{tpu_custom_call.1} parent=5 // pred_region
        %s534 = ssub.s32 %s35, 1
        %s535 = sand.u32 %s62, 1
        %s536 = scalar_lea.sflag [#allocation4], %s535
        %s537 = sand.u32 %s62, 1
        %s538 = smul.addr %s537, 8
        %s539 = scalar_lea.vmem [#allocation3], %s538
        // Predicated region
        $region73: #{tpu_custom_call.1} parent=71 // pred_check
          %p540 = pneg %p75
        $region74: #{tpu_custom_call.1} parent=71 // pred_check_branch
          %542 = sbr.rel (%p540) target = $region76
        $region75: #{tpu_custom_call.1} parent=71 // pred_region
          %543 = dma.done %s536, 128
        $region76: #{tpu_custom_call.1} parent=71 // pred_fallthru
          _
        %s544 = sand.u32 %s40, 1
        %s545 = scalar_lea.sflag [#allocation7], %s544
        %s546 = sand.u32 %s88, 1
        %s547 = smul.addr %s546, 8
        %s548 = scalar_lea.vmem [#allocation6], %s547
        // Predicated region
        $region77: #{tpu_custom_call.1} parent=71 // pred_check
          %p549 = pneg %p101
        $region78: #{tpu_custom_call.1} parent=71 // pred_check_branch
          %551 = sbr.rel (%p549) target = $region80
        $region79: #{tpu_custom_call.1} parent=71 // pred_region
          %552 = dma.done %s545, 128
        $region80: #{tpu_custom_call.1} parent=71 // pred_fallthru
          _
        %s553 = sand.u32 %s40, 1
        %s554 = scalar_lea.sflag [#allocation7], %s553
        %s555 = sand.u32 %s116, 1
        %s556 = smul.addr %s555, 4
        %s557 = scalar_lea.vmem [#allocation8], %s556
        // Predicated region
        $region81: #{tpu_custom_call.1} parent=71 // pred_check
          %p558 = pneg %p129
        $region82: #{tpu_custom_call.1} parent=71 // pred_check_branch
          %560 = sbr.rel (%p558) target = $region84
        $region83: #{tpu_custom_call.1} parent=71 // pred_region
          %561 = dma.done %s554, 64
        $region84: #{tpu_custom_call.1} parent=71 // pred_fallthru
          _
        // Predicated region
        $region85: #{tpu_custom_call.1} parent=71 // pred_check
          %p562 = pneg %p150
        $region86: #{tpu_custom_call.1} parent=71 // pred_check_branch
          %564 = sbr.rel (%p562) target = $region88
        $region87: #{tpu_custom_call.1} parent=71 // pred_region
          %565 = dma.done [#allocation10], 256
        $region88: #{tpu_custom_call.1} parent=71 // pred_fallthru
          _
        // Predicated region
        $region89: #{tpu_custom_call.1} parent=71 // pred_check
          %p566 = pneg %p234
        $region90: #{tpu_custom_call.1} parent=71 // pred_check_branch
          %568 = sbr.rel (%p566) target = $region92
        $region91: #{tpu_custom_call.1} parent=71 // pred_region
          %569 = dma.done [#allocation10], 256
        $region92: #{tpu_custom_call.1} parent=71 // pred_fallthru
          _
        // Predicated region
        $region93: #{tpu_custom_call.1} parent=71 // pred_check
          %p570 = pneg %p255
        $region94: #{tpu_custom_call.1} parent=71 // pred_check_branch
          %572 = sbr.rel (%p570) target = $region96
        $region95: #{tpu_custom_call.1} parent=71 // pred_region
          %573 = dma.done [#allocation13], 16
        $region96: #{tpu_custom_call.1} parent=71 // pred_fallthru
          _
        %s574 = sand.u32 %s62, 1
        %s575 = scalar_lea.sflag [#allocation4], %s574
        %s576 = sand.u32 %s62, 1
        %s577 = smul.addr %s576, 8
        %s578 = scalar_lea.vmem [#allocation3], %s577
        %p579 = pneg %p75
        %p580 = pneg %p72
        %s581 = sand.u32 %s40, 1
        %s582 = scalar_lea.sflag [#allocation7], %s581
        %s583 = sand.u32 %s88, 1
        %s584 = smul.addr %s583, 8
        %s585 = scalar_lea.vmem [#allocation6], %s584
        %p586 = pneg %p101
        %p587 = pneg %p98
        %s588 = sand.u32 %s40, 1
        %s589 = scalar_lea.sflag [#allocation7], %s588
        %s590 = sand.u32 %s116, 1
        %s591 = smul.addr %s590, 4
        %s592 = scalar_lea.vmem [#allocation8], %s591
        %p593 = pneg %p129
        %p594 = pneg %p126
        %p595 = pneg %p150
        %p596 = pneg %p147
        %p597 = pneg %p171
        %p598 = pneg %p168
        %p599 = pneg %p192
        %p600 = pneg %p189
        %p601 = pneg %p213
        %p602 = pneg %p210
        %p603 = pneg %p234
        %p604 = pneg %p231
        %p605 = pneg %p255
        %p606 = pneg %p252
        %p607 = pneg %p276
        %p608 = pneg %p273
        %p609 = pneg %p297
        %p610 = pneg %p294
        %p611 = pneg %p318
        %p612 = pneg %p315
        %p613 = pneg %p339
        %p614 = pneg %p336
        %p615 = pneg %p367
        %p616 = pneg %p364
        %s617 = sand.u32 %s354, 1
        %s618 = scalar_lea.sflag [#allocation5], %s617
        %s619 = sand.u32 %s354, 1
        %s620 = smul.addr %s619, 32
        %s621 = scalar_lea.vmem [#allocation14], %s620
        %p622 = pneg %p395
        %p623 = pneg %p392
        %s624 = sand.u32 %s382, 1
        %s625 = scalar_lea.sflag [#allocation16], %s624
        %s626 = sand.u32 %s382, 1
        %s627 = smul.addr %s626, 8
        %s628 = scalar_lea.vmem [#allocation15], %s627
        %v632 = vld [vmem:[%s539] sm:$0xff]
        %v633 = vpack.c.bf16 %v632, %v632
        %v634 = vld [vmem:[%s548] sm:$0xff]
        %v635 = vpack.c.bf16 %v634, %v634
        %v636 = vld [vmem:[#allocation9] sm:$0xf]
        %v637 = vld [vmem:[#allocation9 + $0x4] sm:$0xf]
        %v638 = vld [vmem:[#allocation9 + $0x8] sm:$0xf]
        %v639 = vld [vmem:[#allocation9 + $0xc] sm:$0xf]
        %v640 = vld [vmem:[%s4] sm:$0x1]
        %v642 = vlaneseq
        %v643 = vshrl.u32 %v642, 7
        %v644 = vsub.s32 0, %v643
        %v645 = vrot.slane %v640, %v644
        %v651 = vunpack.c.l.b16 %v636
        %v652 = vunpack.c.l.b16 %v637
        %v653 = vunpack.c.l.b16 %v638
        %v654 = vunpack.c.l.b16 %v639
        %v655 = vpack.c.b16 %v652, %v651
        %v656 = vpack.c.b16 %v654, %v653
        %vm659 = vcmask 261120
        %v661 = vsel %vm659, %v633, 0
        %663 = vmatprep.subr.bf16.mxu0 0
        %664 = vmatpush1.bf16.msra.mxu0 %v655
        %665 = vmatprep.subr.bf16.mxu0 0
        %666 = vmatpush1.bf16.msra.mxu0 %v656
        %667 = vmatprep.subr.bf16.mxu0 0
        %668 = vmatpush1.bf16.msra.mxu0 0
        %669 = vmatprep.subr.bf16.mxu0 0
        %670 = vmatpush1.bf16.msra.mxu0 0
        %671 = vmatprep.subr.bf16.mxu0 0
        %672 = vmatpush1.bf16.msra.mxu0 0
        %673 = vmatprep.subr.bf16.mxu0 0
        %674 = vmatpush1.bf16.msra.mxu0 0
        %675 = vmatprep.subr.bf16.mxu0 0
        %676 = vmatpush1.bf16.msra.mxu0 0
        %677 = vmatprep.subr.bf16.mxu0 0
        %678 = vmatpush1.bf16.msra.mxu0 0
        %679 = vmatprep.subr.bf16.mxu0 0
        %680 = vmatpush1.bf16.msra.mxu0 0
        %681 = vmatprep.subr.bf16.mxu0 0
        %682 = vmatpush1.bf16.msra.mxu0 0
        %683 = vmatprep.subr.bf16.mxu0 0
        %684 = vmatpush1.bf16.msra.mxu0 0
        %685 = vmatprep.subr.bf16.mxu0 0
        %686 = vmatpush1.bf16.msra.mxu0 0
        %687 = vmatprep.subr.bf16.mxu0 0
        %688 = vmatpush1.bf16.msra.mxu0 0
        %689 = vmatprep.subr.bf16.mxu0 0
        %690 = vmatpush1.bf16.msra.mxu0 0
        %691 = vmatprep.subr.bf16.mxu0 0
        %692 = vmatpush1.bf16.msra.mxu0 0
        %693 = vmatprep.subr.bf16.mxu0 0
        %694 = vmatpush1.bf16.msra.mxu0 0
        %695 = vmatprep.mubr.bf16.mxu0 0
        %696 = vmatmul.mubr.bf16.gmra.mrb[0].mxu0 %v661
        %v697 = vpop.f32.mrb[0].mxu0
        %v698 = vadd.f32 %v645, %v697
        %v699 = vpop.f32.mrb[0].mxu0
        %v700 = vpop.f32.mrb[0].mxu0
        %v701 = vpop.f32.mrb[0].mxu0
        %702 = vdwg.mxu0
        %v703 = vld [vmem:[%s5] sm:$0xf]
        %v704 = vld [vmem:[%s5 + $0x4] sm:$0xf]
        %v705 = vld [vmem:[%s5 + $0x8] sm:$0xf]
        %v706 = vld [vmem:[%s5 + $0xc] sm:$0xf]
        %v707 = vld [vmem:[%s6] sm:$0x1]
        %v709 = vlaneseq
        %v710 = vshrl.u32 %v709, 7
        %v711 = vsub.s32 0, %v710
        %v712 = vrot.slane %v707, %v711
        %v718 = vunpack.c.l.b16 %v703
        %v719 = vunpack.c.l.b16 %v704
        %v720 = vunpack.c.l.b16 %v705
        %v721 = vunpack.c.l.b16 %v706
        %v722 = vpack.c.b16 %v719, %v718
        %v723 = vpack.c.b16 %v721, %v720
        %v727 = vsel %vm659, %v635, 0
        %729 = vmatprep.subr.bf16.mxu0 0
        %730 = vmatpush1.bf16.msra.mxu0 %v722
        %731 = vmatprep.subr.bf16.mxu0 0
        %732 = vmatpush1.bf16.msra.mxu0 %v723
        %733 = vmatprep.subr.bf16.mxu0 0
        %734 = vmatpush1.bf16.msra.mxu0 0
        %735 = vmatprep.subr.bf16.mxu0 0
        %736 = vmatpush1.bf16.msra.mxu0 0
        %737 = vmatprep.subr.bf16.mxu0 0
        %738 = vmatpush1.bf16.msra.mxu0 0
        %739 = vmatprep.subr.bf16.mxu0 0
        %740 = vmatpush1.bf16.msra.mxu0 0
        %741 = vmatprep.subr.bf16.mxu0 0
        %742 = vmatpush1.bf16.msra.mxu0 0
        %743 = vmatprep.subr.bf16.mxu0 0
        %744 = vmatpush1.bf16.msra.mxu0 0
        %745 = vmatprep.subr.bf16.mxu0 0
        %746 = vmatpush1.bf16.msra.mxu0 0
        %747 = vmatprep.subr.bf16.mxu0 0
        %748 = vmatpush1.bf16.msra.mxu0 0
        %749 = vmatprep.subr.bf16.mxu0 0
        %750 = vmatpush1.bf16.msra.mxu0 0
        %751 = vmatprep.subr.bf16.mxu0 0
        %752 = vmatpush1.bf16.msra.mxu0 0
        %753 = vmatprep.subr.bf16.mxu0 0
        %754 = vmatpush1.bf16.msra.mxu0 0
        %755 = vmatprep.subr.bf16.mxu0 0
        %756 = vmatpush1.bf16.msra.mxu0 0
        %757 = vmatprep.subr.bf16.mxu0 0
        %758 = vmatpush1.bf16.msra.mxu0 0
        %759 = vmatprep.subr.bf16.mxu0 0
        %760 = vmatpush1.bf16.msra.mxu0 0
        %761 = vmatprep.mubr.bf16.mxu0 0
        %762 = vmatmul.mubr.bf16.gmra.mrb[0].mxu0 %v727
        %v763 = vpop.f32.mrb[0].mxu0
        %v764 = vadd.f32 %v712, %v763
        %v765 = vpop.f32.mrb[0].mxu0
        %v766 = vpop.f32.mrb[0].mxu0
        %v767 = vpop.f32.mrb[0].mxu0
        %768 = vdwg.mxu0
        %v769 = vld [vmem:[#allocation11] sm:$0xf]
        %v770 = vld [vmem:[#allocation11 + $0x4] sm:$0xf]
        %v771 = vld [vmem:[#allocation11 + $0x8] sm:$0xf]
        %v772 = vld [vmem:[#allocation11 + $0xc] sm:$0xf]
        %v773 = vld [vmem:[#allocation12] sm:$0x1]
        %v775 = vlaneseq
        %v776 = vshrl.u32 %v775, 7
        %v777 = vsub.s32 0, %v776
        %v778 = vrot.slane %v773, %v777
        %v784 = vunpack.c.l.b16 %v769
        %v785 = vunpack.c.l.b16 %v770
        %v786 = vunpack.c.l.b16 %v771
        %v787 = vunpack.c.l.b16 %v772
        %v788 = vpack.c.b16 %v785, %v784
        %v789 = vpack.c.b16 %v787, %v786
        %792 = vmatprep.subr.bf16.mxu0 0
        %793 = vmatpush1.bf16.msra.mxu0 %v788
        %794 = vmatprep.subr.bf16.mxu0 0
        %795 = vmatpush1.bf16.msra.mxu0 %v789
        %796 = vmatprep.subr.bf16.mxu0 0
        %797 = vmatpush1.bf16.msra.mxu0 0
        %798 = vmatprep.subr.bf16.mxu0 0
        %799 = vmatpush1.bf16.msra.mxu0 0
        %800 = vmatprep.subr.bf16.mxu0 0
        %801 = vmatpush1.bf16.msra.mxu0 0
        %802 = vmatprep.subr.bf16.mxu0 0
        %803 = vmatpush1.bf16.msra.mxu0 0
        %804 = vmatprep.subr.bf16.mxu0 0
        %805 = vmatpush1.bf16.msra.mxu0 0
        %806 = vmatprep.subr.bf16.mxu0 0
        %807 = vmatpush1.bf16.msra.mxu0 0
        %808 = vmatprep.subr.bf16.mxu0 0
        %809 = vmatpush1.bf16.msra.mxu0 0
        %810 = vmatprep.subr.bf16.mxu0 0
        %811 = vmatpush1.bf16.msra.mxu0 0
        %812 = vmatprep.subr.bf16.mxu0 0
        %813 = vmatpush1.bf16.msra.mxu0 0
        %814 = vmatprep.subr.bf16.mxu0 0
        %815 = vmatpush1.bf16.msra.mxu0 0
        %816 = vmatprep.subr.bf16.mxu0 0
        %817 = vmatpush1.bf16.msra.mxu0 0
        %818 = vmatprep.subr.bf16.mxu0 0
        %819 = vmatpush1.bf16.msra.mxu0 0
        %820 = vmatprep.subr.bf16.mxu0 0
        %821 = vmatpush1.bf16.msra.mxu0 0
        %822 = vmatprep.subr.bf16.mxu0 0
        %823 = vmatpush1.bf16.msra.mxu0 0
        %824 = vmatprep.mubr.bf16.mxu0 0
        %825 = vmatmul.mubr.bf16.gmra.mrb[0].mxu0 %v727
        %v826 = vpop.f32.mrb[0].mxu0
        %v827 = vadd.f32 %v778, %v826
        %v828 = vpop.f32.mrb[0].mxu0
        %v829 = vpop.f32.mrb[0].mxu0
        %v830 = vpop.f32.mrb[0].mxu0
        %831 = vdwg.mxu0
        %v832 = vmul.f32 %v698, 0.35355338
        %v833 = vld [vmem:[%s557] sm:$0xf]
        %vm834 = vcmp.gt.bf16.partialorder %v833, 0
        %v835 = vpack.c.bf16 %v832, %v832
        %v836 = vpack.c.bf16 %v764, %v764
        %v837 = vpack.c.bf16 %v827, %v827
        %vm838 = vcmask 64512
        %v840 = vsel %vm838, %v835, 0
        %v843 = vsel %vm838, %v836, 0
        %845 = vmatprep.subr.bf16.mxu0 0
        %846 = vmatpush1.bf16.xpose.msra.mxu0 %v843
        %847 = vmatprep.subr.bf16.mxu0 0
        %848 = vmatpush1.bf16.xpose.msra.mxu0 0
        %849 = vmatprep.subr.bf16.mxu0 0
        %850 = vmatpush1.bf16.xpose.msra.mxu0 0
        %851 = vmatprep.subr.bf16.mxu0 0
        %852 = vmatpush1.bf16.xpose.msra.mxu0 0
        %853 = vmatprep.subr.bf16.mxu0 0
        %854 = vmatpush1.bf16.xpose.msra.mxu0 0
        %855 = vmatprep.subr.bf16.mxu0 0
        %856 = vmatpush1.bf16.xpose.msra.mxu0 0
        %857 = vmatprep.subr.bf16.mxu0 0
        %858 = vmatpush1.bf16.xpose.msra.mxu0 0
        %859 = vmatprep.subr.bf16.mxu0 0
        %860 = vmatpush1.bf16.xpose.msra.mxu0 0
        %861 = vmatprep.subr.bf16.mxu0 0
        %862 = vmatpush1.bf16.xpose.msra.mxu0 0
        %863 = vmatprep.subr.bf16.mxu0 0
        %864 = vmatpush1.bf16.xpose.msra.mxu0 0
        %865 = vmatprep.subr.bf16.mxu0 0
        %866 = vmatpush1.bf16.xpose.msra.mxu0 0
        %867 = vmatprep.subr.bf16.mxu0 0
        %868 = vmatpush1.bf16.xpose.msra.mxu0 0
        %869 = vmatprep.subr.bf16.mxu0 0
        %870 = vmatpush1.bf16.xpose.msra.mxu0 0
        %871 = vmatprep.subr.bf16.mxu0 0
        %872 = vmatpush1.bf16.xpose.msra.mxu0 0
        %873 = vmatprep.subr.bf16.mxu0 0
        %874 = vmatpush1.bf16.xpose.msra.mxu0 0
        %875 = vmatprep.subr.bf16.mxu0 0
        %876 = vmatpush1.bf16.xpose.msra.mxu0 0
        %877 = vmatprep.mubr.bf16.mxu0 0
        %878 = vmatmul.mubr.bf16.gmra.mrb[0].mxu0 %v840
        %v879 = vpop.f32.mrb[0].mxu0
        %v880 = vadd.f32 0.0, %v879
        %v881 = vpop.f32.mrb[0].mxu0
        %v882 = vpop.f32.mrb[0].mxu0
        %v883 = vpop.f32.mrb[0].mxu0
        %884 = vdwg.mxu0
        %v885 = vsel %vm834, 65537, 0
        %v886 = vunpack.c.l.b16 %v885
        %vm887 = vcmp.ne.s32.totalorder %v886, 0
        %v888 = vsel %vm887, %v880, -1e+09
        %v889 = vsel %vm838, %v888, -inf
        %890 = vmax.xlane.f32.xlu0 %v889
        %v891 = vpop.xlane.xlu0 %890
        %v892 = vsub.f32 %v888, %v891
        %v893 = vmul.f32 %v892, 1.442695
        %v894 = vpow.pop %v893
        %v895 = vsel %vm838, %v894, 0.0
        %896 = vadd.xlane.f32.xlu0 %v895
        %v897 = vpop.xlane.xlu0 %896
        %v898 = vrcp.pop %v897
        %v899 = vmul.f32 %v894, %v898
        %900 = vst.msk [vmem:[%s621] sm:$0xff] %vm838, %v899
        %v901 = vpack.c.bf16 %v899, %v899
        %v903 = vsel %vm838, %v901, 0
        %vm905 = vcmask 1043456
        %v907 = vsel %vm905, %v837, 0
        %909 = vmatprep.subr.bf16.mxu0 0
        %910 = vmatpush1.bf16.msra.mxu0 %v907
        %911 = vmatprep.subr.bf16.mxu0 0
        %912 = vmatpush1.bf16.msra.mxu0 0
        %913 = vmatprep.subr.bf16.mxu0 0
        %914 = vmatpush1.bf16.msra.mxu0 0
        %915 = vmatprep.subr.bf16.mxu0 0
        %916 = vmatpush1.bf16.msra.mxu0 0
        %917 = vmatprep.subr.bf16.mxu0 0
        %918 = vmatpush1.bf16.msra.mxu0 0
        %919 = vmatprep.subr.bf16.mxu0 0
        %920 = vmatpush1.bf16.msra.mxu0 0
        %921 = vmatprep.subr.bf16.mxu0 0
        %922 = vmatpush1.bf16.msra.mxu0 0
        %923 = vmatprep.subr.bf16.mxu0 0
        %924 = vmatpush1.bf16.msra.mxu0 0
        %925 = vmatprep.subr.bf16.mxu0 0
        %926 = vmatpush1.bf16.msra.mxu0 0
        %927 = vmatprep.subr.bf16.mxu0 0
        %928 = vmatpush1.bf16.msra.mxu0 0
        %929 = vmatprep.subr.bf16.mxu0 0
        %930 = vmatpush1.bf16.msra.mxu0 0
        %931 = vmatprep.subr.bf16.mxu0 0
        %932 = vmatpush1.bf16.msra.mxu0 0
        %933 = vmatprep.subr.bf16.mxu0 0
        %934 = vmatpush1.bf16.msra.mxu0 0
        %935 = vmatprep.subr.bf16.mxu0 0
        %936 = vmatpush1.bf16.msra.mxu0 0
        %937 = vmatprep.subr.bf16.mxu0 0
        %938 = vmatpush1.bf16.msra.mxu0 0
        %939 = vmatprep.subr.bf16.mxu0 0
        %940 = vmatpush1.bf16.msra.mxu0 0
        %941 = vmatprep.mubr.bf16.mxu0 0
        %942 = vmatmul.mubr.bf16.gmra.mrb[0].mxu0 %v903
        %v943 = vpop.f32.mrb[0].mxu0
        %v944 = vadd.f32 0.0, %v943
        %v945 = vpop.f32.mrb[0].mxu0
        %v946 = vpop.f32.mrb[0].mxu0
        %v947 = vpop.f32.mrb[0].mxu0
        %948 = vdwg.mxu0
        %949 = vst.msk [vmem:[#allocation2] sm:$0xff] %vm838, %v944
        %951 = vrot.lane.b32.xlu0 %v835, 120
        %v952 = vpop.permute.xlu0 %951
        %954 = vrot.lane.b32.xlu0 %v836, 120
        %v955 = vpop.permute.xlu0 %954
        %v957 = vsel %vm838, %v952, 0
        %v960 = vsel %vm838, %v955, 0
        %962 = vmatprep.subr.bf16.mxu0 0
        %963 = vmatpush1.bf16.xpose.msra.mxu0 %v960
        %964 = vmatprep.subr.bf16.mxu0 0
        %965 = vmatpush1.bf16.xpose.msra.mxu0 0
        %966 = vmatprep.subr.bf16.mxu0 0
        %967 = vmatpush1.bf16.xpose.msra.mxu0 0
        %968 = vmatprep.subr.bf16.mxu0 0
        %969 = vmatpush1.bf16.xpose.msra.mxu0 0
        %970 = vmatprep.subr.bf16.mxu0 0
        %971 = vmatpush1.bf16.xpose.msra.mxu0 0
        %972 = vmatprep.subr.bf16.mxu0 0
        %973 = vmatpush1.bf16.xpose.msra.mxu0 0
        %974 = vmatprep.subr.bf16.mxu0 0
        %975 = vmatpush1.bf16.xpose.msra.mxu0 0
        %976 = vmatprep.subr.bf16.mxu0 0
        %977 = vmatpush1.bf16.xpose.msra.mxu0 0
        %978 = vmatprep.subr.bf16.mxu0 0
        %979 = vmatpush1.bf16.xpose.msra.mxu0 0
        %980 = vmatprep.subr.bf16.mxu0 0
        %981 = vmatpush1.bf16.xpose.msra.mxu0 0
        %982 = vmatprep.subr.bf16.mxu0 0
        %983 = vmatpush1.bf16.xpose.msra.mxu0 0
        %984 = vmatprep.subr.bf16.mxu0 0
        %985 = vmatpush1.bf16.xpose.msra.mxu0 0
        %986 = vmatprep.subr.bf16.mxu0 0
        %987 = vmatpush1.bf16.xpose.msra.mxu0 0
        %988 = vmatprep.subr.bf16.mxu0 0
        %989 = vmatpush1.bf16.xpose.msra.mxu0 0
        %990 = vmatprep.subr.bf16.mxu0 0
        %991 = vmatpush1.bf16.xpose.msra.mxu0 0
        %992 = vmatprep.subr.bf16.mxu0 0
        %993 = vmatpush1.bf16.xpose.msra.mxu0 0
        %994 = vmatprep.mubr.bf16.mxu0 0
        %995 = vmatmul.mubr.bf16.gmra.mrb[0].mxu0 %v957
        %v996 = vpop.f32.mrb[0].mxu0
        %v997 = vadd.f32 0.0, %v996
        %v998 = vpop.f32.mrb[0].mxu0
        %v999 = vpop.f32.mrb[0].mxu0
        %v1000 = vpop.f32.mrb[0].mxu0
        %1001 = vdwg.mxu0
        %v1002 = vsel %vm887, %v997, -1e+09
        %v1003 = vsel %vm838, %v1002, -inf
        %1004 = vmax.xlane.f32.xlu0 %v1003
        %v1005 = vpop.xlane.xlu0 %1004
        %v1006 = vsub.f32 %v1002, %v1005
        %v1007 = vmul.f32 %v1006, 1.442695
        %v1008 = vpow.pop %v1007
        %v1009 = vsel %vm838, %v1008, 0.0
        %1010 = vadd.xlane.f32.xlu0 %v1009
        %v1011 = vpop.xlane.xlu0 %1010
        %v1012 = vrcp.pop %v1011
        %v1013 = vmul.f32 %v1008, %v1012
        %s1014 = scalar_lea.vmem %s621, 8 [#allocation14]
        %1015 = vst.msk [vmem:[%s1014] sm:$0xff] %vm838, %v1013
        %v1016 = vpack.c.bf16 %v1013, %v1013
        %1018 = vrot.lane.b32.xlu0 %v837, 120
        %v1019 = vpop.permute.xlu0 %1018
        %v1021 = vsel %vm838, %v1016, 0
        %v1024 = vsel %vm905, %v1019, 0
        %1026 = vmatprep.subr.bf16.mxu0 0
        %1027 = vmatpush1.bf16.msra.mxu0 %v1024
        %1028 = vmatprep.subr.bf16.mxu0 0
        %1029 = vmatpush1.bf16.msra.mxu0 0
        %1030 = vmatprep.subr.bf16.mxu0 0
        %1031 = vmatpush1.bf16.msra.mxu0 0
        %1032 = vmatprep.subr.bf16.mxu0 0
        %1033 = vmatpush1.bf16.msra.mxu0 0
        %1034 = vmatprep.subr.bf16.mxu0 0
        %1035 = vmatpush1.bf16.msra.mxu0 0
        %1036 = vmatprep.subr.bf16.mxu0 0
        %1037 = vmatpush1.bf16.msra.mxu0 0
        %1038 = vmatprep.subr.bf16.mxu0 0
        %1039 = vmatpush1.bf16.msra.mxu0 0
        %1040 = vmatprep.subr.bf16.mxu0 0
        %1041 = vmatpush1.bf16.msra.mxu0 0
        %1042 = vmatprep.subr.bf16.mxu0 0
        %1043 = vmatpush1.bf16.msra.mxu0 0
        %1044 = vmatprep.subr.bf16.mxu0 0
        %1045 = vmatpush1.bf16.msra.mxu0 0
        %1046 = vmatprep.subr.bf16.mxu0 0
        %1047 = vmatpush1.bf16.msra.mxu0 0
        %1048 = vmatprep.subr.bf16.mxu0 0
        %1049 = vmatpush1.bf16.msra.mxu0 0
        %1050 = vmatprep.subr.bf16.mxu0 0
        %1051 = vmatpush1.bf16.msra.mxu0 0
        %1052 = vmatprep.subr.bf16.mxu0 0
        %1053 = vmatpush1.bf16.msra.mxu0 0
        %1054 = vmatprep.subr.bf16.mxu0 0
        %1055 = vmatpush1.bf16.msra.mxu0 0
        %1056 = vmatprep.subr.bf16.mxu0 0
        %1057 = vmatpush1.bf16.msra.mxu0 0
        %1058 = vmatprep.mubr.bf16.mxu0 0
        %1059 = vmatmul.mubr.bf16.gmra.mrb[0].mxu0 %v1021
        %v1060 = vpop.f32.mrb[0].mxu0
        %v1061 = vadd.f32 0.0, %v1060
        %v1062 = vpop.f32.mrb[0].mxu0
        %v1063 = vpop.f32.mrb[0].mxu0
        %v1064 = vpop.f32.mrb[0].mxu0
        %1065 = vdwg.mxu0
        %1067 = vrot.lane.b32.xlu0 %v1061, 8
        %v1068 = vpop.permute.xlu0 %1067
        %vm1070 = vcmask 130112
        %1071 = vst.msk [vmem:[#allocation2] sm:$0xff] %vm1070, %v1068
        %1072 = vrot.lane.b32.xlu0 %v835, 112
        %v1073 = vpop.permute.xlu0 %1072
        %1074 = vrot.lane.b32.xlu0 %v836, 112
        %v1075 = vpop.permute.xlu0 %1074
        %v1077 = vsel %vm838, %v1073, 0
        %v1080 = vsel %vm838, %v1075, 0
        %1082 = vmatprep.subr.bf16.mxu0 0
        %1083 = vmatpush1.bf16.xpose.msra.mxu0 %v1080
        %1084 = vmatprep.subr.bf16.mxu0 0
        %1085 = vmatpush1.bf16.xpose.msra.mxu0 0
        %1086 = vmatprep.subr.bf16.mxu0 0
        %1087 = vmatpush1.bf16.xpose.msra.mxu0 0
        %1088 = vmatprep.subr.bf16.mxu0 0
        %1089 = vmatpush1.bf16.xpose.msra.mxu0 0
        %1090 = vmatprep.subr.bf16.mxu0 0
        %1091 = vmatpush1.bf16.xpose.msra.mxu0 0
        %1092 = vmatprep.subr.bf16.mxu0 0
        %1093 = vmatpush1.bf16.xpose.msra.mxu0 0
        %1094 = vmatprep.subr.bf16.mxu0 0
        %1095 = vmatpush1.bf16.xpose.msra.mxu0 0
        %1096 = vmatprep.subr.bf16.mxu0 0
        %1097 = vmatpush1.bf16.xpose.msra.mxu0 0
        %1098 = vmatprep.subr.bf16.mxu0 0
        %1099 = vmatpush1.bf16.xpose.msra.mxu0 0
        %1100 = vmatprep.subr.bf16.mxu0 0
        %1101 = vmatpush1.bf16.xpose.msra.mxu0 0
        %1102 = vmatprep.subr.bf16.mxu0 0
        %1103 = vmatpush1.bf16.xpose.msra.mxu0 0
        %1104 = vmatprep.subr.bf16.mxu0 0
        %1105 = vmatpush1.bf16.xpose.msra.mxu0 0
        %1106 = vmatprep.subr.bf16.mxu0 0
        %1107 = vmatpush1.bf16.xpose.msra.mxu0 0
        %1108 = vmatprep.subr.bf16.mxu0 0
        %1109 = vmatpush1.bf16.xpose.msra.mxu0 0
        %1110 = vmatprep.subr.bf16.mxu0 0
        %1111 = vmatpush1.bf16.xpose.msra.mxu0 0
        %1112 = vmatprep.subr.bf16.mxu0 0
        %1113 = vmatpush1.bf16.xpose.msra.mxu0 0
        %1114 = vmatprep.mubr.bf16.mxu0 0
        %1115 = vmatmul.mubr.bf16.gmra.mrb[0].mxu0 %v1077
        %v1116 = vpop.f32.mrb[0].mxu0
        %v1117 = vadd.f32 0.0, %v1116
        %v1118 = vpop.f32.mrb[0].mxu0
        %v1119 = vpop.f32.mrb[0].mxu0
        %v1120 = vpop.f32.mrb[0].mxu0
        %1121 = vdwg.mxu0
        %v1122 = vsel %vm887, %v1117, -1e+09
        %v1123 = vsel %vm838, %v1122, -inf
        %1124 = vmax.xlane.f32.xlu0 %v1123
        %v1125 = vpop.xlane.xlu0 %1124
        %v1126 = vsub.f32 %v1122, %v1125
        %v1127 = vmul.f32 %v1126, 1.442695
        %v1128 = vpow.pop %v1127
        %v1129 = vsel %vm838, %v1128, 0.0
        %1130 = vadd.xlane.f32.xlu0 %v1129
        %v1131 = vpop.xlane.xlu0 %1130
        %v1132 = vrcp.pop %v1131
        %v1133 = vmul.f32 %v1128, %v1132
        %s1134 = scalar_lea.vmem %s621, 16 [#allocation14]
        %1135 = vst.msk [vmem:[%s1134] sm:$0xff] %vm838, %v1133
        %v1136 = vpack.c.bf16 %v1133, %v1133
        %1137 = vrot.lane.b32.xlu0 %v837, 112
        %v1138 = vpop.permute.xlu0 %1137
        %v1140 = vsel %vm838, %v1136, 0
        %v1143 = vsel %vm905, %v1138, 0
        %1145 = vmatprep.subr.bf16.mxu0 0
        %1146 = vmatpush1.bf16.msra.mxu0 %v1143
        %1147 = vmatprep.subr.bf16.mxu0 0
        %1148 = vmatpush1.bf16.msra.mxu0 0
        %1149 = vmatprep.subr.bf16.mxu0 0
        %1150 = vmatpush1.bf16.msra.mxu0 0
        %1151 = vmatprep.subr.bf16.mxu0 0
        %1152 = vmatpush1.bf16.msra.mxu0 0
        %1153 = vmatprep.subr.bf16.mxu0 0
        %1154 = vmatpush1.bf16.msra.mxu0 0
        %1155 = vmatprep.subr.bf16.mxu0 0
        %1156 = vmatpush1.bf16.msra.mxu0 0
        %1157 = vmatprep.subr.bf16.mxu0 0
        %1158 = vmatpush1.bf16.msra.mxu0 0
        %1159 = vmatprep.subr.bf16.mxu0 0
        %1160 = vmatpush1.bf16.msra.mxu0 0
        %1161 = vmatprep.subr.bf16.mxu0 0
        %1162 = vmatpush1.bf16.msra.mxu0 0
        %1163 = vmatprep.subr.bf16.mxu0 0
        %1164 = vmatpush1.bf16.msra.mxu0 0
        %1165 = vmatprep.subr.bf16.mxu0 0
        %1166 = vmatpush1.bf16.msra.mxu0 0
        %1167 = vmatprep.subr.bf16.mxu0 0
        %1168 = vmatpush1.bf16.msra.mxu0 0
        %1169 = vmatprep.subr.bf16.mxu0 0
        %1170 = vmatpush1.bf16.msra.mxu0 0
        %1171 = vmatprep.subr.bf16.mxu0 0
        %1172 = vmatpush1.bf16.msra.mxu0 0
        %1173 = vmatprep.subr.bf16.mxu0 0
        %1174 = vmatpush1.bf16.msra.mxu0 0
        %1175 = vmatprep.subr.bf16.mxu0 0
        %1176 = vmatpush1.bf16.msra.mxu0 0
        %1177 = vmatprep.mubr.bf16.mxu0 0
        %1178 = vmatmul.mubr.bf16.gmra.mrb[0].mxu0 %v1140
        %v1179 = vpop.f32.mrb[0].mxu0
        %v1180 = vadd.f32 0.0, %v1179
        %v1181 = vpop.f32.mrb[0].mxu0
        %v1182 = vpop.f32.mrb[0].mxu0
        %v1183 = vpop.f32.mrb[0].mxu0
        %1184 = vdwg.mxu0
        %1186 = vrot.lane.b32.xlu0 %v1180, 16
        %v1187 = vpop.permute.xlu0 %1186
        %vm1189 = vcmask 195712
        %1190 = vst.msk [vmem:[#allocation2] sm:$0xff] %vm1189, %v1187
        %1191 = vrot.lane.b32.xlu0 %v835, 104
        %v1192 = vpop.permute.xlu0 %1191
        %1193 = vrot.lane.b32.xlu0 %v836, 104
        %v1194 = vpop.permute.xlu0 %1193
        %v1196 = vsel %vm838, %v1192, 0
        %v1199 = vsel %vm838, %v1194, 0
        %1201 = vmatprep.subr.bf16.mxu0 0
        %1202 = vmatpush1.bf16.xpose.msra.mxu0 %v1199
        %1203 = vmatprep.subr.bf16.mxu0 0
        %1204 = vmatpush1.bf16.xpose.msra.mxu0 0
        %1205 = vmatprep.subr.bf16.mxu0 0
        %1206 = vmatpush1.bf16.xpose.msra.mxu0 0
        %1207 = vmatprep.subr.bf16.mxu0 0
        %1208 = vmatpush1.bf16.xpose.msra.mxu0 0
        %1209 = vmatprep.subr.bf16.mxu0 0
        %1210 = vmatpush1.bf16.xpose.msra.mxu0 0
        %1211 = vmatprep.subr.bf16.mxu0 0
        %1212 = vmatpush1.bf16.xpose.msra.mxu0 0
        %1213 = vmatprep.subr.bf16.mxu0 0
        %1214 = vmatpush1.bf16.xpose.msra.mxu0 0
        %1215 = vmatprep.subr.bf16.mxu0 0
        %1216 = vmatpush1.bf16.xpose.msra.mxu0 0
        %1217 = vmatprep.subr.bf16.mxu0 0
        %1218 = vmatpush1.bf16.xpose.msra.mxu0 0
        %1219 = vmatprep.subr.bf16.mxu0 0
        %1220 = vmatpush1.bf16.xpose.msra.mxu0 0
        %1221 = vmatprep.subr.bf16.mxu0 0
        %1222 = vmatpush1.bf16.xpose.msra.mxu0 0
        %1223 = vmatprep.subr.bf16.mxu0 0
        %1224 = vmatpush1.bf16.xpose.msra.mxu0 0
        %1225 = vmatprep.subr.bf16.mxu0 0
        %1226 = vmatpush1.bf16.xpose.msra.mxu0 0
        %1227 = vmatprep.subr.bf16.mxu0 0
        %1228 = vmatpush1.bf16.xpose.msra.mxu0 0
        %1229 = vmatprep.subr.bf16.mxu0 0
        %1230 = vmatpush1.bf16.xpose.msra.mxu0 0
        %1231 = vmatprep.subr.bf16.mxu0 0
        %1232 = vmatpush1.bf16.xpose.msra.mxu0 0
        %1233 = vmatprep.mubr.bf16.mxu0 0
        %1234 = vmatmul.mubr.bf16.gmra.mrb[0].mxu0 %v1196
        %v1235 = vpop.f32.mrb[0].mxu0
        %v1236 = vadd.f32 0.0, %v1235
        %v1237 = vpop.f32.mrb[0].mxu0
        %v1238 = vpop.f32.mrb[0].mxu0
        %v1239 = vpop.f32.mrb[0].mxu0
        %1240 = vdwg.mxu0
        %v1241 = vsel %vm887, %v1236, -1e+09
        %v1242 = vsel %vm838, %v1241, -inf
        %1243 = vmax.xlane.f32.xlu0 %v1242
        %v1244 = vpop.xlane.xlu0 %1243
        %v1245 = vsub.f32 %v1241, %v1244
        %v1246 = vmul.f32 %v1245, 1.442695
        %v1247 = vpow.pop %v1246
        %v1248 = vsel %vm838, %v1247, 0.0
        %1249 = vadd.xlane.f32.xlu0 %v1248
        %v1250 = vpop.xlane.xlu0 %1249
        %v1251 = vrcp.pop %v1250
        %v1252 = vmul.f32 %v1247, %v1251
        %s1253 = scalar_lea.vmem %s621, 24 [#allocation14]
        %1254 = vst.msk [vmem:[%s1253] sm:$0xff] %vm838, %v1252
        %v1255 = vpack.c.bf16 %v1252, %v1252
        %1256 = vrot.lane.b32.xlu0 %v837, 104
        %v1257 = vpop.permute.xlu0 %1256
        %v1259 = vsel %vm838, %v1255, 0
        %v1262 = vsel %vm905, %v1257, 0
        %1264 = vmatprep.subr.bf16.mxu0 0
        %1265 = vmatpush1.bf16.msra.mxu0 %v1262
        %1266 = vmatprep.subr.bf16.mxu0 0
        %1267 = vmatpush1.bf16.msra.mxu0 0
        %1268 = vmatprep.subr.bf16.mxu0 0
        %1269 = vmatpush1.bf16.msra.mxu0 0
        %1270 = vmatprep.subr.bf16.mxu0 0
        %1271 = vmatpush1.bf16.msra.mxu0 0
        %1272 = vmatprep.subr.bf16.mxu0 0
        %1273 = vmatpush1.bf16.msra.mxu0 0
        %1274 = vmatprep.subr.bf16.mxu0 0
        %1275 = vmatpush1.bf16.msra.mxu0 0
        %1276 = vmatprep.subr.bf16.mxu0 0
        %1277 = vmatpush1.bf16.msra.mxu0 0
        %1278 = vmatprep.subr.bf16.mxu0 0
        %1279 = vmatpush1.bf16.msra.mxu0 0
        %1280 = vmatprep.subr.bf16.mxu0 0
        %1281 = vmatpush1.bf16.msra.mxu0 0
        %1282 = vmatprep.subr.bf16.mxu0 0
        %1283 = vmatpush1.bf16.msra.mxu0 0
        %1284 = vmatprep.subr.bf16.mxu0 0
        %1285 = vmatpush1.bf16.msra.mxu0 0
        %1286 = vmatprep.subr.bf16.mxu0 0
        %1287 = vmatpush1.bf16.msra.mxu0 0
        %1288 = vmatprep.subr.bf16.mxu0 0
        %1289 = vmatpush1.bf16.msra.mxu0 0
        %1290 = vmatprep.subr.bf16.mxu0 0
        %1291 = vmatpush1.bf16.msra.mxu0 0
        %1292 = vmatprep.subr.bf16.mxu0 0
        %1293 = vmatpush1.bf16.msra.mxu0 0
        %1294 = vmatprep.subr.bf16.mxu0 0
        %1295 = vmatpush1.bf16.msra.mxu0 0
        %1296 = vmatprep.mubr.bf16.mxu0 0
        %1297 = vmatmul.mubr.bf16.gmra.mrb[0].mxu0 %v1259
        %v1298 = vpop.f32.mrb[0].mxu0
        %v1299 = vadd.f32 0.0, %v1298
        %v1300 = vpop.f32.mrb[0].mxu0
        %v1301 = vpop.f32.mrb[0].mxu0
        %v1302 = vpop.f32.mrb[0].mxu0
        %1303 = vdwg.mxu0
        %1305 = vrot.lane.b32.xlu0 %v1299, 24
        %v1306 = vpop.permute.xlu0 %1305
        %vm1308 = vcmask 261312
        %1309 = vst.msk [vmem:[#allocation2] sm:$0xff] %vm1308, %v1306
        %v1310 = vld [vmem:[#allocation2] sm:$0xff]
        %v1311 = vpack.c.bf16 %v1310, %v1310
        %v1312 = vld [vmem:[%s9] sm:$0xf]
        %v1313 = vld [vmem:[%s9 + $0x4] sm:$0xf]
        %v1314 = vld [vmem:[%s9 + $0x8] sm:$0xf]
        %v1315 = vld [vmem:[%s9 + $0xc] sm:$0xf]
        %v1316 = vld [vmem:[%s10] sm:$0x1]
        %v1318 = vlaneseq
        %v1319 = vshrl.u32 %v1318, 7
        %v1320 = vsub.s32 0, %v1319
        %v1321 = vrot.slane %v1316, %v1320
        %v1327 = vunpack.c.l.b16 %v1312
        %v1328 = vunpack.c.l.b16 %v1313
        %v1329 = vunpack.c.l.b16 %v1314
        %v1330 = vunpack.c.l.b16 %v1315
        %v1331 = vpack.c.b16 %v1328, %v1327
        %v1332 = vpack.c.b16 %v1330, %v1329
        %v1336 = vsel %vm659, %v1311, 0
        %1338 = vmatprep.subr.bf16.mxu0 0
        %1339 = vmatpush1.bf16.msra.mxu0 %v1331
        %1340 = vmatprep.subr.bf16.mxu0 0
        %1341 = vmatpush1.bf16.msra.mxu0 %v1332
        %1342 = vmatprep.subr.bf16.mxu0 0
        %1343 = vmatpush1.bf16.msra.mxu0 0
        %1344 = vmatprep.subr.bf16.mxu0 0
        %1345 = vmatpush1.bf16.msra.mxu0 0
        %1346 = vmatprep.subr.bf16.mxu0 0
        %1347 = vmatpush1.bf16.msra.mxu0 0
        %1348 = vmatprep.subr.bf16.mxu0 0
        %1349 = vmatpush1.bf16.msra.mxu0 0
        %1350 = vmatprep.subr.bf16.mxu0 0
        %1351 = vmatpush1.bf16.msra.mxu0 0
        %1352 = vmatprep.subr.bf16.mxu0 0
        %1353 = vmatpush1.bf16.msra.mxu0 0
        %1354 = vmatprep.subr.bf16.mxu0 0
        %1355 = vmatpush1.bf16.msra.mxu0 0
        %1356 = vmatprep.subr.bf16.mxu0 0
        %1357 = vmatpush1.bf16.msra.mxu0 0
        %1358 = vmatprep.subr.bf16.mxu0 0
        %1359 = vmatpush1.bf16.msra.mxu0 0
        %1360 = vmatprep.subr.bf16.mxu0 0
        %1361 = vmatpush1.bf16.msra.mxu0 0
        %1362 = vmatprep.subr.bf16.mxu0 0
        %1363 = vmatpush1.bf16.msra.mxu0 0
        %1364 = vmatprep.subr.bf16.mxu0 0
        %1365 = vmatpush1.bf16.msra.mxu0 0
        %1366 = vmatprep.subr.bf16.mxu0 0
        %1367 = vmatpush1.bf16.msra.mxu0 0
        %1368 = vmatprep.subr.bf16.mxu0 0
        %1369 = vmatpush1.bf16.msra.mxu0 0
        %1370 = vmatprep.mubr.bf16.mxu0 0
        %1371 = vmatmul.mubr.bf16.gmra.mrb[0].mxu0 %v1336
        %v1372 = vpop.f32.mrb[0].mxu0
        %v1373 = vadd.f32 %v1321, %v1372
        %v1374 = vpop.f32.mrb[0].mxu0
        %v1375 = vpop.f32.mrb[0].mxu0
        %v1376 = vpop.f32.mrb[0].mxu0
        %1377 = vdwg.mxu0
        %v1378 = vadd.f32 %v632, %v1373
        %v1379 = vsel %vm659, %v1378, 0.0
        %1380 = vadd.xlane.f32.xlu0 %v1379
        %v1381 = vpop.xlane.xlu0 %1380
        %v1382 = vrcp.pop 32.0
        %v1383 = vmul.f32 %v1381, %v1382
        %v1384 = vsub.f32 %v1378, %v1383
        %v1385 = vmul.f32 %v1384, %v1384
        %v1386 = vsel %vm659, %v1385, 0.0
        %1387 = vadd.xlane.f32.xlu0 %v1386
        %v1388 = vpop.xlane.xlu0 %1387
        %v1389 = vmul.f32 %v1388, %v1382
        %v1390 = vadd.f32 %v1389, 1e-05
        %v1391 = vrsqrt.pop %v1390
        %v1392 = vmul.f32 %v1384, %v1391
        %v1393 = vld [vmem:[%s11] sm:$0x1]
        %v1395 = vlaneseq
        %v1396 = vshrl.u32 %v1395, 7
        %v1397 = vsub.s32 0, %v1396
        %v1398 = vrot.slane %v1393, %v1397
        %v1400 = vmul.f32 %v1392, %v1398
        %v1401 = vld [vmem:[%s12] sm:$0x1]
        %v1403 = vlaneseq
        %v1404 = vshrl.u32 %v1403, 7
        %v1405 = vsub.s32 0, %v1404
        %v1406 = vrot.slane %v1401, %v1405
        %v1408 = vadd.f32 %v1400, %v1406
        %1409 = vst.msk [vmem:[%s628] sm:$0xff] %vm659, %v1408
        %s1410 = sand.u32 %s354, 1
        %s1411 = scalar_lea.sflag [#allocation5], %s1410
        %s1412 = sand.u32 %s354, 1
        %s1413 = smul.addr %s1412, 32
        %s1414 = scalar_lea.vmem [#allocation14], %s1413
        %s1415 = sand.u32 %s382, 1
        %s1416 = scalar_lea.sflag [#allocation16], %s1415
        %s1417 = sand.u32 %s382, 1
        %s1418 = smul.addr %s1417, 8
        %s1419 = scalar_lea.vmem [#allocation15], %s1418
        // Predicated region
        $region97: #{tpu_custom_call.1} parent=71 // pred_check
          %p1420 = pneg %p364
        $region98: #{tpu_custom_call.1} parent=71 // pred_check_branch
          %1422 = sbr.rel (%p1420) target = $region100
        $region99: #{tpu_custom_call.1} parent=71 // pred_region
          %s1424 = ssub.s32 512, 512
          %1425 = vsyncadd %s1411, %s1424
          %s1426 = smul.addr %s44, 4
          %s1427 = sadd.s32 %s45, %s1426
          %s1428 = smul.addr %s1427, 128
          %s1429 = scalar_lea.hbm %s13, %s1428
          %s1430 = sshll.u32 %s1414, 4
          %s1431 = int_to_ptr.vmem [resolvable:$true] %s1430
          %1436 = dma.vmem_to_hbm [thread:$0]  %s1431, 512, %s1429, %s1411, 128, 128, 8
        $region100: #{tpu_custom_call.1} parent=71 // pred_fallthru
          _
        // Predicated region
        $region101: #{tpu_custom_call.1} parent=71 // pred_check
          %p1437 = pneg %p392
        $region102: #{tpu_custom_call.1} parent=71 // pred_check_branch
          %1439 = sbr.rel (%p1437) target = $region104
        $region103: #{tpu_custom_call.1} parent=71 // pred_region
          %s1441 = ssub.s32 128, 128
          %1442 = vsyncadd %s1416, %s1441
          %s1443 = sadd.s32 %s45, %s44
          %s1444 = smul.addr %s1443, 128
          %s1445 = scalar_lea.hbm %s14, %s1444
          %s1447 = sshll.u32 %s1419, 4
          %s1448 = int_to_ptr.vmem [resolvable:$true] %s1447
          %1450 = dma.vmem_to_hbm [thread:$0]  %s1448, 128, %s1445, %s1416
        $region104: #{tpu_custom_call.1} parent=71 // pred_fallthru
          _
      $region72: #{tpu_custom_call.1} parent=5 // pred_fallthru
        _
      %p1451 = scmp.le.s32.totalorder 2, %s35
      // Predicated region
      $region105: #{tpu_custom_call.1} parent=5 // pred_check
        %p1452 = pneg %p1451
      $region106: #{tpu_custom_call.1} parent=5 // pred_check_branch
        %1454 = sbr.rel (%p1452) target = $region108
      $region107: #{tpu_custom_call.1} parent=5 // pred_region
        %s1455 = ssub.s32 %s35, 2
        // Predicated region
        $region109: #{tpu_custom_call.1} parent=107 // pred_check
          %p1456 = pneg %p370
        $region110: #{tpu_custom_call.1} parent=107 // pred_check_branch
          %1458 = sbr.rel (%p1456) target = $region112
        $region111: #{tpu_custom_call.1} parent=107 // pred_region
          %s1459 = sand.u32 %s355, 1
          %s1460 = scalar_lea.sflag [#allocation5], %s1459
          %s1461 = sand.u32 %s355, 1
          %s1462 = smul.addr %s1461, 32
          %s1463 = scalar_lea.vmem [#allocation14], %s1462
          %1464 = dma.done %s1460, 512
        $region112: #{tpu_custom_call.1} parent=107 // pred_fallthru
          _
        // Predicated region
        $region113: #{tpu_custom_call.1} parent=107 // pred_check
          %p1465 = pneg %p398
        $region114: #{tpu_custom_call.1} parent=107 // pred_check_branch
          %1467 = sbr.rel (%p1465) target = $region116
        $region115: #{tpu_custom_call.1} parent=107 // pred_region
          %s1468 = sand.u32 %s383, 1
          %s1469 = scalar_lea.sflag [#allocation16], %s1468
          %s1470 = sand.u32 %s383, 1
          %s1471 = smul.addr %s1470, 8
          %s1472 = scalar_lea.vmem [#allocation15], %s1471
          %1473 = dma.done %s1469, 128
        $region116: #{tpu_custom_call.1} parent=107 // pred_fallthru
          _
      $region108: #{tpu_custom_call.1} parent=5 // pred_fallthru
        _
    $region6: #{tpu_custom_call.1} parent=1 // loop_footer
      %s39 = sadd.s32 1, %s35
    $region7: #{tpu_custom_call.1} parent=1 // loop_footer_branch
      %34 = sbr.rel target = $region3
    $region8: #{tpu_custom_call.1} parent=1 // loop_exit
      _
    %1474 = vsyncpa [#allocation4], 1
    %s1475 = scalar_lea.sflag [#allocation4], 1
    %1476 = vsyncpa %s1475, 1
    %1477 = vsyncpa [#allocation7], 1
    %s1478 = scalar_lea.sflag [#allocation7], 1
    %1479 = vsyncpa %s1478, 1
    %1480 = vsyncpa [#allocation10], 1
    %1481 = vsyncpa [#allocation13], 1
    %1482 = vsyncpa [#allocation5], 1
    %s1483 = scalar_lea.sflag [#allocation5], 1
    %1484 = vsyncpa %s1483, 1
    %1485 = vsyncpa [#allocation16], 1
    %s1486 = scalar_lea.sflag [#allocation16], 1
    %1487 = vsyncpa %s1486, 1

</llo_original>
